<compile_context>
chip_gen: v7x
topology: tpu7x:2x2x1
jax: 0.10.0
libtpu: 0.0.40
codegen_flags: <defaults>
</compile_context>

<pallas_src>
import jax
import jax.numpy as jnp
import numpy as np
from jax.experimental import pallas as pl
from jax.experimental.pallas import tpu as pltpu

IN_CH = 24            # obs feature channels (already excludes latents, tuple-obs path)
H = 32                # size_hidden_layers
LATENT = 8            # latent_size
NUM_HEADS = 10        # default num_heads in LatentAttentionBackbone
AW = NUM_HEADS * LATENT   # 80 attention logits per row
NEG_SLOPE = 0.01      # nn.LeakyReLU default
MAX_TILE_N = 4096     # batch rows per grid step (before folding)


def _leaky(x):
    return jnp.maximum(x, NEG_SLOPE * x)


def _bf(x):
    return x.astype(jnp.bfloat16)


def _mm(a, b):
    """bf16 MXU operands, f32 accumulation."""
    return jnp.dot(a, b, preferred_element_type=jnp.float32)


def latent_attention_kernel(obs_ref, lat_ref,
                            w0, b0, w1, b1,          # obs_encoder[0], obs_encoder[2]
                            wa, ba,                  # attention head (w2-composed, mean-centred)
                            wfe, bfe,                # fc_backbone[0] enc rows (w2-composed)
                            tilemat, sel,            # 0/1 helper matrices (bf16)
                            wf1l,                    # fc_backbone[0] latent-attention rows
                            wf2, bf2,                # fc_backbone[1]
                            out_ref):
    # obs_encoder (the third linear, w2, is folded into wa / wfe at pack time)
    h0 = _leaky(_mm(_bf(obs_ref[...]), w0[...]) + b0[...])          # (tg, F*H)
    h1b = _bf(_leaky(_mm(_bf(h0), w1[...]) + b1[...]))              # (tg, F*H) bf16

    # Centred attention logits (per-head mean already subtracted via weight composition)
    aw = _mm(h1b, wa[...]) + ba[...]                                # (tg, F*AW)
    acc = _mm(h1b, wfe[...]) + bfe[...]                             # (tg, F*H) enc part of fc1

    # Per-head softmax + convex combination of latents, fully vectorised.
    # Centred logits => per-head exp-sum >= ~LATENT, so den never underflows to 0;
    # the clamp only guards absolute overflow (within-head spread > ~80).
    e = jnp.exp(jnp.minimum(aw, 80.0))                              # (tg, F*AW), EUP
    lat_t = _mm(_bf(lat_ref[...]), tilemat[...])                    # (tg, F*AW) latents tiled/head
    num = _mm(_bf(e * lat_t), sel[...])                             # (tg, F*NUM_HEADS)
    den = _mm(_bf(e), sel[...])                                     # (tg, F*NUM_HEADS)
    s_all = num * pl.reciprocal(den, approx=True)                   # convex combinations

    # fc_backbone[0] latent-attention rows, then fc_backbone[1] + LeakyReLU
    acc = acc + _mm(_bf(s_all), wf1l[...])
    out_ref[...] = _leaky(_mm(_bf(acc), wf2[...]) + bf2[...]).astype(out_ref.dtype)


_ORDER = ("w0", "b0", "w1", "b1", "wa", "ba", "wfe", "bfe",
          "tilemat", "sel", "wf1l", "wf2", "bf2")


def _default_fold():
    """8 batch rows folded per lane-group on 256-wide MXUs (v6e/v7x), 4 on <=v5."""
    try:
        kind = jax.devices()[0].device_kind.lower()
    except Exception:
        return 8
    for tag in ("v2", "v3", "v4", "v5"):
        if tag in kind:
            return 4
    return 8


def pack_params(p, fold):
    """Compose / centre / fold the torch-layout params for the folded kernel.

    In production this would be computed once per parameter update, not per forward.
    """
    f32, bf16 = jnp.float32, jnp.bfloat16
    eye_f = jnp.eye(fold, dtype=f32)

    def fold_w(w):                       # block-diagonal: kron(I_F, W)
        return jnp.kron(eye_f, jnp.asarray(w, f32))

    def fold_b(b):                       # lane-tile the (1, out) bias
        return jnp.tile(jnp.asarray(b, f32).reshape(1, -1), (1, fold))

    # Compose obs_encoder[2] (w2/b2) into both linear consumers of `enc`.
    wa_c = p["w2"] @ p["wa"]
    ba_c = p["b2"] @ p["wa"] + p["ba"]
    wfe_c = p["w2"] @ p["wf1e"]
    bfe_c = p["b2"] @ p["wf1e"] + p["bf1"]

    # Pre-compose the per-head mean shift (exactly softmax-invariant); gives den >= ~LATENT.
    center = np.eye(AW, dtype=np.float32) - np.kron(
        np.eye(NUM_HEADS, dtype=np.float32),
        np.full((LATENT, LATENT), 1.0 / LATENT, dtype=np.float32))
    center = jnp.asarray(center)
    wa_c = wa_c @ center
    ba_c = ba_c @ center

    # 0/1 helper matrices (exact in bf16).
    tilemat = np.tile(np.eye(LATENT, dtype=np.float32), (1, NUM_HEADS))                   # (8, 80)
    sel = np.kron(np.eye(NUM_HEADS, dtype=np.float32), np.ones((LATENT, 1), np.float32))  # (80, 10)

    return {
        "w0": fold_w(p["w0"]).astype(bf16), "b0": fold_b(p["b0"]),
        "w1": fold_w(p["w1"]).astype(bf16), "b1": fold_b(p["b1"]),
        "wa": fold_w(wa_c).astype(bf16),    "ba": fold_b(ba_c),
        "wfe": fold_w(wfe_c).astype(bf16),  "bfe": fold_b(bfe_c),
        "tilemat": fold_w(tilemat).astype(bf16),
        "sel": fold_w(sel).astype(bf16),
        "wf1l": fold_w(p["wf1l"]).astype(bf16),
        "wf2": fold_w(p["wf2"]).astype(bf16), "bf2": fold_b(p["bf2"]),
    }


def latent_attention_backbone(obs, latents, params, *, fold=None,
                              max_tile_n=MAX_TILE_N, out_dtype=jnp.float32):
    N = obs.shape[0]
    F = _default_fold() if fold is None else fold
    pk = pack_params(params, F)

    # Pad only up to a multiple of the fold factor (< F extra rows).  Raggedness w.r.t.
    # the batch tile is handled by Pallas' masked trailing block -> no full-array copies.
    n_pad = ((N + F - 1) // F) * F
    if n_pad != N:
        obs = jnp.pad(obs, ((0, n_pad - N), (0, 0)))
        latents = jnp.pad(latents, ((0, n_pad - N), (0, 0)))
    n_g = n_pad // F
    obs_f = obs.astype(jnp.float32).reshape(n_g, F * IN_CH)       # free row-major views
    lat_f = latents.astype(jnp.float32).reshape(n_g, F * LATENT)

    # Batch tile (in folded rows): large for step-overhead amortisation; split in two when a
    # single tile would cover the batch so both v7x TensorCores see work; sublane-aligned.
    tile_g = min(max(max_tile_n // F, 1), n_g)
    if tile_g == n_g and n_g >= 32:
        tile_g = (n_g + 1) // 2
    if tile_g < n_g:
        tile_g = min(((tile_g + 7) // 8) * 8, n_g)
    grid = pl.cdiv(n_g, tile_g)

    def row_spec(cols):
        return pl.BlockSpec((tile_g, cols), lambda i: (i, 0))

    def full_spec(a):
        return pl.BlockSpec(a.shape, lambda i: (0, 0))

    out = pl.pallas_call(
        latent_attention_kernel,
        out_shape=jax.ShapeDtypeStruct((n_g, F * H), out_dtype),
        grid=(grid,),
        in_specs=[row_spec(F * IN_CH), row_spec(F * LATENT)]
                 + [full_spec(pk[k]) for k in _ORDER],
        out_specs=row_spec(F * H),
        compiler_params=pltpu.CompilerParams(
            dimension_semantics=("parallel",),
            vmem_limit_bytes=32 * 1024 * 1024),
    )(obs_f, lat_f, *[pk[k] for k in _ORDER])

    return out.reshape(n_pad, H)[:N]


def reference(obs, latents, p):
    """Pure-JAX f32 mirror of the PyTorch forward (torch semantics)."""
    h0 = _leaky(obs @ p["w0"] + p["b0"])
    h1 = _leaky(h0 @ p["w1"] + p["b1"])
    enc = h1 @ p["w2"] + p["b2"]
    aw = (enc @ p["wa"] + p["ba"]).reshape(-1, NUM_HEADS, LATENT)
    aw = jax.nn.softmax(aw, axis=-1)
    lat_att = jnp.sum(aw * latents[:, None, :], axis=2)                 # (N, NUM_HEADS)
    cat = jnp.concatenate([enc, lat_att], axis=1)                        # (N, H + NUM_HEADS)
    wf1 = jnp.concatenate([p["wf1e"], p["wf1l"]], axis=0)
    fc1 = cat @ wf1 + p["bf1"]
    return _leaky(fc1 @ p["wf2"] + p["bf2"])


def init_params(key):
    ks = jax.random.split(key, 16)
    n = lambda k, shape: (0.1 * jax.random.normal(k, shape)).astype(jnp.float32)
    return {
        # obs_encoder
        "w0": n(ks[0], (IN_CH, H)), "b0": n(ks[1], (1, H)),
        "w1": n(ks[2], (H, H)),     "b1": n(ks[3], (1, H)),
        "w2": n(ks[4], (H, H)),     "b2": n(ks[5], (1, H)),
        # attention head
        "wa": n(ks[6], (H, NUM_HEADS * LATENT)), "ba": n(ks[7], (1, NUM_HEADS * LATENT)),
        # fc_backbone[0]: Linear(H + NUM_HEADS -> H), split into enc rows and latent-att rows
        "wf1e": n(ks[8], (H, H)), "wf1l": n(ks[9], (NUM_HEADS, H)), "bf1": n(ks[10], (1, H)),
        # fc_backbone[1]: Linear(H -> H)
        "wf2": n(ks[11], (H, H)), "bf2": n(ks[12], (1, H)),
    }


if __name__ == "__main__":
    key = jax.random.PRNGKey(0)
    k_obs, k_lat, k_par = jax.random.split(key, 3)
    params = init_params(k_par)

    # Small batch, intentionally not fold-aligned (exercises the < F-row tail pad).
    N = 20
    obs = jax.random.normal(k_obs, (N, IN_CH), dtype=jnp.float32)
    latents = jax.random.normal(k_lat, (N, LATENT), dtype=jnp.float32)
    out = jax.block_until_ready(latent_attention_backbone(obs, latents, params))
    ref = jax.block_until_ready(reference(obs, latents, params))
    # Kernel uses bf16 MXU operands + approx reciprocal; compare against the pure-f32
    # reference with a correspondingly loosened tolerance.
    np.testing.assert_allclose(np.asarray(out), np.asarray(ref), rtol=2e-2, atol=2e-2)

    # Multi-step grid with a non-dividing trailing block (Pallas-masked writeback) and the
    # "parallel" batch axis spanning several steps.
    N2 = 200
    obs2 = jax.random.normal(jax.random.PRNGKey(1), (N2, IN_CH), dtype=jnp.float32)
    lat2 = jax.random.normal(jax.random.PRNGKey(2), (N2, LATENT), dtype=jnp.float32)
    out2 = jax.block_until_ready(
        latent_attention_backbone(obs2, lat2, params, max_tile_n=64))
    ref2 = jax.block_until_ready(reference(obs2, lat2, params))
    np.testing.assert_allclose(np.asarray(out2), np.asarray(ref2), rtol=2e-2, atol=2e-2)

    print("KERNEL_OK")
</pallas_src>

<mosaic_0001>
module attributes {stable_mosaic.version = 11 : i64} {
  func.func @latent_attention_kernel(%arg0: i32, %arg1: memref<3x192xf32, #tpu.memory_space<vmem>>, %arg2: memref<3x64xf32, #tpu.memory_space<vmem>>, %arg3: memref<192x256xbf16, #tpu.memory_space<vmem>>, %arg4: memref<1x256xf32, #tpu.memory_space<vmem>>, %arg5: memref<256x256xbf16, #tpu.memory_space<vmem>>, %arg6: memref<1x256xf32, #tpu.memory_space<vmem>>, %arg7: memref<256x640xbf16, #tpu.memory_space<vmem>>, %arg8: memref<1x640xf32, #tpu.memory_space<vmem>>, %arg9: memref<256x256xbf16, #tpu.memory_space<vmem>>, %arg10: memref<1x256xf32, #tpu.memory_space<vmem>>, %arg11: memref<64x640xbf16, #tpu.memory_space<vmem>>, %arg12: memref<640x80xbf16, #tpu.memory_space<vmem>>, %arg13: memref<80x256xbf16, #tpu.memory_space<vmem>>, %arg14: memref<256x256xbf16, #tpu.memory_space<vmem>>, %arg15: memref<1x256xf32, #tpu.memory_space<vmem>>, %arg16: memref<3x256xf32, #tpu.memory_space<vmem>>) attributes {dimension_semantics = [#tpu.dimension_semantics<parallel>], iteration_bounds = array<i64: 1>, scalar_prefetch = 0 : i64, scratch_operands = 0 : i64, tpu.core_type = #tpu.core_type<tc>, window_params = [{transform_indices = @transform_0, window_bounds = array<i64: 3, 192>}, {transform_indices = @transform_1, window_bounds = array<i64: 3, 64>}, {pipeline_mode = #tpu.pipeline_mode<synchronous>, transform_indices = @transform_2, window_bounds = array<i64: 192, 256>}, {pipeline_mode = #tpu.pipeline_mode<synchronous>, transform_indices = @transform_3, window_bounds = array<i64: 1, 256>}, {pipeline_mode = #tpu.pipeline_mode<synchronous>, transform_indices = @transform_4, window_bounds = array<i64: 256, 256>}, {pipeline_mode = #tpu.pipeline_mode<synchronous>, transform_indices = @transform_5, window_bounds = array<i64: 1, 256>}, {pipeline_mode = #tpu.pipeline_mode<synchronous>, transform_indices = @transform_6, window_bounds = array<i64: 256, 640>}, {pipeline_mode = #tpu.pipeline_mode<synchronous>, transform_indices = @transform_7, window_bounds = array<i64: 1, 640>}, {pipeline_mode = #tpu.pipeline_mode<synchronous>, transform_indices = @transform_8, window_bounds = array<i64: 256, 256>}, {pipeline_mode = #tpu.pipeline_mode<synchronous>, transform_indices = @transform_9, window_bounds = array<i64: 1, 256>}, {pipeline_mode = #tpu.pipeline_mode<synchronous>, transform_indices = @transform_10, window_bounds = array<i64: 64, 640>}, {pipeline_mode = #tpu.pipeline_mode<synchronous>, transform_indices = @transform_11, window_bounds = array<i64: 640, 80>}, {pipeline_mode = #tpu.pipeline_mode<synchronous>, transform_indices = @transform_12, window_bounds = array<i64: 80, 256>}, {pipeline_mode = #tpu.pipeline_mode<synchronous>, transform_indices = @transform_13, window_bounds = array<i64: 256, 256>}, {pipeline_mode = #tpu.pipeline_mode<synchronous>, transform_indices = @transform_14, window_bounds = array<i64: 1, 256>}, {transform_indices = @transform_15, window_bounds = array<i64: 3, 256>}]} {
    %c0 = arith.constant 0 : index
    %c0_0 = arith.constant 0 : index
    %0 = vector.load %arg1[%c0, %c0_0] : memref<3x192xf32, #tpu.memory_space<vmem>>, vector<3x192xf32>
    %1 = arith.truncf %0 : vector<3x192xf32> to vector<3x192xbf16>
    %c0_1 = arith.constant 0 : index
    %c0_2 = arith.constant 0 : index
    %2 = vector.load %arg3[%c0_1, %c0_2] : memref<192x256xbf16, #tpu.memory_space<vmem>>, vector<192x256xbf16>
    %cst = arith.constant dense<0.000000e+00> : vector<3x256xf32>
    %3 = tpu.matmul %1, %2, %cst {dimension_numbers = #tpu.dot_dimension_numbers<[1], [0], [0], [1], [0, 0, 1, 1], [], []>} : vector<3x192xbf16>, vector<192x256xbf16>, vector<3x256xf32> -> vector<3x256xf32>
    %c0_3 = arith.constant 0 : index
    %c0_4 = arith.constant 0 : index
    %4 = vector.load %arg4[%c0_3, %c0_4] : memref<1x256xf32, #tpu.memory_space<vmem>>, vector<1x256xf32>
    %5 = vector.broadcast %4 : vector<1x256xf32> to vector<3x256xf32>
    %6 = arith.addf %3, %5 : vector<3x256xf32>
    %cst_5 = arith.constant 0.00999999977 : f32
    %7 = vector.broadcast %cst_5 : f32 to vector<3x256xf32>
    %8 = arith.mulf %7, %6 : vector<3x256xf32>
    %9 = arith.maximumf %6, %8 : vector<3x256xf32>
    %10 = arith.truncf %9 : vector<3x256xf32> to vector<3x256xbf16>
    %c0_6 = arith.constant 0 : index
    %c0_7 = arith.constant 0 : index
    %11 = vector.load %arg5[%c0_6, %c0_7] : memref<256x256xbf16, #tpu.memory_space<vmem>>, vector<256x256xbf16>
    %cst_8 = arith.constant dense<0.000000e+00> : vector<3x256xf32>
    %12 = tpu.matmul %10, %11, %cst_8 {dimension_numbers = #tpu.dot_dimension_numbers<[1], [0], [0], [1], [0, 0, 1, 1], [], []>} : vector<3x256xbf16>, vector<256x256xbf16>, vector<3x256xf32> -> vector<3x256xf32>
    %c0_9 = arith.constant 0 : index
    %c0_10 = arith.constant 0 : index
    %13 = vector.load %arg6[%c0_9, %c0_10] : memref<1x256xf32, #tpu.memory_space<vmem>>, vector<1x256xf32>
    %14 = vector.broadcast %13 : vector<1x256xf32> to vector<3x256xf32>
    %15 = arith.addf %12, %14 : vector<3x256xf32>
    %cst_11 = arith.constant 0.00999999977 : f32
    %16 = vector.broadcast %cst_11 : f32 to vector<3x256xf32>
    %17 = arith.mulf %16, %15 : vector<3x256xf32>
    %18 = arith.maximumf %15, %17 : vector<3x256xf32>
    %19 = arith.truncf %18 : vector<3x256xf32> to vector<3x256xbf16>
    %c0_12 = arith.constant 0 : index
    %c0_13 = arith.constant 0 : index
    %20 = vector.load %arg7[%c0_12, %c0_13] : memref<256x640xbf16, #tpu.memory_space<vmem>>, vector<256x640xbf16>
    %cst_14 = arith.constant dense<0.000000e+00> : vector<3x640xf32>
    %21 = tpu.matmul %19, %20, %cst_14 {dimension_numbers = #tpu.dot_dimension_numbers<[1], [0], [0], [1], [0, 0, 1, 1], [], []>} : vector<3x256xbf16>, vector<256x640xbf16>, vector<3x640xf32> -> vector<3x640xf32>
    %c0_15 = arith.constant 0 : index
    %c0_16 = arith.constant 0 : index
    %22 = vector.load %arg8[%c0_15, %c0_16] : memref<1x640xf32, #tpu.memory_space<vmem>>, vector<1x640xf32>
    %23 = vector.broadcast %22 : vector<1x640xf32> to vector<3x640xf32>
    %24 = arith.addf %21, %23 : vector<3x640xf32>
    %c0_17 = arith.constant 0 : index
    %c0_18 = arith.constant 0 : index
    %25 = vector.load %arg9[%c0_17, %c0_18] : memref<256x256xbf16, #tpu.memory_space<vmem>>, vector<256x256xbf16>
    %cst_19 = arith.constant dense<0.000000e+00> : vector<3x256xf32>
    %26 = tpu.matmul %19, %25, %cst_19 {dimension_numbers = #tpu.dot_dimension_numbers<[1], [0], [0], [1], [0, 0, 1, 1], [], []>} : vector<3x256xbf16>, vector<256x256xbf16>, vector<3x256xf32> -> vector<3x256xf32>
    %c0_20 = arith.constant 0 : index
    %c0_21 = arith.constant 0 : index
    %27 = vector.load %arg10[%c0_20, %c0_21] : memref<1x256xf32, #tpu.memory_space<vmem>>, vector<1x256xf32>
    %28 = vector.broadcast %27 : vector<1x256xf32> to vector<3x256xf32>
    %29 = arith.addf %26, %28 : vector<3x256xf32>
    %cst_22 = arith.constant 8.000000e+01 : f32
    %30 = vector.broadcast %cst_22 : f32 to vector<3x640xf32>
    %31 = arith.minimumf %24, %30 : vector<3x640xf32>
    %32 = math.exp %31 : vector<3x640xf32>
    %c0_23 = arith.constant 0 : index
    %c0_24 = arith.constant 0 : index
    %33 = vector.load %arg2[%c0_23, %c0_24] : memref<3x64xf32, #tpu.memory_space<vmem>>, vector<3x64xf32>
    %34 = arith.truncf %33 : vector<3x64xf32> to vector<3x64xbf16>
    %c0_25 = arith.constant 0 : index
    %c0_26 = arith.constant 0 : index
    %35 = vector.load %arg11[%c0_25, %c0_26] : memref<64x640xbf16, #tpu.memory_space<vmem>>, vector<64x640xbf16>
    %cst_27 = arith.constant dense<0.000000e+00> : vector<3x640xf32>
    %36 = tpu.matmul %34, %35, %cst_27 {dimension_numbers = #tpu.dot_dimension_numbers<[1], [0], [0], [1], [0, 0, 1, 1], [], []>} : vector<3x64xbf16>, vector<64x640xbf16>, vector<3x640xf32> -> vector<3x640xf32>
    %37 = arith.mulf %32, %36 : vector<3x640xf32>
    %38 = arith.truncf %37 : vector<3x640xf32> to vector<3x640xbf16>
    %c0_28 = arith.constant 0 : index
    %c0_29 = arith.constant 0 : index
    %39 = vector.load %arg12[%c0_28, %c0_29] : memref<640x80xbf16, #tpu.memory_space<vmem>>, vector<640x80xbf16>
    %cst_30 = arith.constant dense<0.000000e+00> : vector<3x80xf32>
    %40 = tpu.matmul %38, %39, %cst_30 {dimension_numbers = #tpu.dot_dimension_numbers<[1], [0], [0], [1], [0, 0, 1, 1], [], []>} : vector<3x640xbf16>, vector<640x80xbf16>, vector<3x80xf32> -> vector<3x80xf32>
    %41 = arith.truncf %32 : vector<3x640xf32> to vector<3x640xbf16>
    %c0_31 = arith.constant 0 : index
    %c0_32 = arith.constant 0 : index
    %42 = vector.load %arg12[%c0_31, %c0_32] : memref<640x80xbf16, #tpu.memory_space<vmem>>, vector<640x80xbf16>
    %cst_33 = arith.constant dense<0.000000e+00> : vector<3x80xf32>
    %43 = tpu.matmul %41, %42, %cst_33 {dimension_numbers = #tpu.dot_dimension_numbers<[1], [0], [0], [1], [0, 0, 1, 1], [], []>} : vector<3x640xbf16>, vector<640x80xbf16>, vector<3x80xf32> -> vector<3x80xf32>
    %44 = tpu.reciprocal %43 {approx = true} : vector<3x80xf32> -> vector<3x80xf32>
    %45 = arith.mulf %40, %44 : vector<3x80xf32>
    %46 = arith.truncf %45 : vector<3x80xf32> to vector<3x80xbf16>
    %c0_34 = arith.constant 0 : index
    %c0_35 = arith.constant 0 : index
    %47 = vector.load %arg13[%c0_34, %c0_35] : memref<80x256xbf16, #tpu.memory_space<vmem>>, vector<80x256xbf16>
    %cst_36 = arith.constant dense<0.000000e+00> : vector<3x256xf32>
    %48 = tpu.matmul %46, %47, %cst_36 {dimension_numbers = #tpu.dot_dimension_numbers<[1], [0], [0], [1], [0, 0, 1, 1], [], []>} : vector<3x80xbf16>, vector<80x256xbf16>, vector<3x256xf32> -> vector<3x256xf32>
    %49 = arith.addf %29, %48 : vector<3x256xf32>
    %50 = arith.truncf %49 : vector<3x256xf32> to vector<3x256xbf16>
    %c0_37 = arith.constant 0 : index
    %c0_38 = arith.constant 0 : index
    %51 = vector.load %arg14[%c0_37, %c0_38] : memref<256x256xbf16, #tpu.memory_space<vmem>>, vector<256x256xbf16>
    %cst_39 = arith.constant dense<0.000000e+00> : vector<3x256xf32>
    %52 = tpu.matmul %50, %51, %cst_39 {dimension_numbers = #tpu.dot_dimension_numbers<[1], [0], [0], [1], [0, 0, 1, 1], [], []>} : vector<3x256xbf16>, vector<256x256xbf16>, vector<3x256xf32> -> vector<3x256xf32>
    %c0_40 = arith.constant 0 : index
    %c0_41 = arith.constant 0 : index
    %53 = vector.load %arg15[%c0_40, %c0_41] : memref<1x256xf32, #tpu.memory_space<vmem>>, vector<1x256xf32>
    %54 = vector.broadcast %53 : vector<1x256xf32> to vector<3x256xf32>
    %55 = arith.addf %52, %54 : vector<3x256xf32>
    %cst_42 = arith.constant 0.00999999977 : f32
    %56 = vector.broadcast %cst_42 : f32 to vector<3x256xf32>
    %57 = arith.mulf %56, %55 : vector<3x256xf32>
    %58 = arith.maximumf %55, %57 : vector<3x256xf32>
    %c0_43 = arith.constant 0 : index
    %c0_44 = arith.constant 0 : index
    %59 = vector.load %arg16[%c0_43, %c0_44] : memref<3x256xf32, #tpu.memory_space<vmem>>, vector<3x256xf32>
    tpu.vector_store %arg16[%c0_43, %c0_44], %58 {strides = array<i32>} : memref<3x256xf32, #tpu.memory_space<vmem>>, vector<3x256xf32>,
    return
  }
  func.func @transform_0(%arg0: i32) -> (i32, i32) {
    %c0_i32 = arith.constant 0 : i32
    %c0_i32_0 = arith.constant 0 : i32
    return %arg0, %c0_i32 : i32, i32
  }
  func.func @transform_1(%arg0: i32) -> (i32, i32) {
    %c0_i32 = arith.constant 0 : i32
    %c0_i32_0 = arith.constant 0 : i32
    return %arg0, %c0_i32 : i32, i32
  }
  func.func @transform_2(%arg0: i32) -> (i32, i32) {
    %c0_i32 = arith.constant 0 : i32
    %c0_i32_0 = arith.constant 0 : i32
    %c0_i32_1 = arith.constant 0 : i32
    return %c0_i32, %c0_i32_0 : i32, i32
  }
  func.func @transform_3(%arg0: i32) -> (i32, i32) {
    %c0_i32 = arith.constant 0 : i32
    %c0_i32_0 = arith.constant 0 : i32
    %c0_i32_1 = arith.constant 0 : i32
    return %c0_i32, %c0_i32_0 : i32, i32
  }
  func.func @transform_4(%arg0: i32) -> (i32, i32) {
    %c0_i32 = arith.constant 0 : i32
    %c0_i32_0 = arith.constant 0 : i32
    %c0_i32_1 = arith.constant 0 : i32
    return %c0_i32, %c0_i32_0 : i32, i32
  }
  func.func @transform_5(%arg0: i32) -> (i32, i32) {
    %c0_i32 = arith.constant 0 : i32
    %c0_i32_0 = arith.constant 0 : i32
    %c0_i32_1 = arith.constant 0 : i32
    return %c0_i32, %c0_i32_0 : i32, i32
  }
  func.func @transform_6(%arg0: i32) -> (i32, i32) {
    %c0_i32 = arith.constant 0 : i32
    %c0_i32_0 = arith.constant 0 : i32
    %c0_i32_1 = arith.constant 0 : i32
    return %c0_i32, %c0_i32_0 : i32, i32
  }
  func.func @transform_7(%arg0: i32) -> (i32, i32) {
    %c0_i32 = arith.constant 0 : i32
    %c0_i32_0 = arith.constant 0 : i32
    %c0_i32_1 = arith.constant 0 : i32
    return %c0_i32, %c0_i32_0 : i32, i32
  }
  func.func @transform_8(%arg0: i32) -> (i32, i32) {
    %c0_i32 = arith.constant 0 : i32
    %c0_i32_0 = arith.constant 0 : i32
    %c0_i32_1 = arith.constant 0 : i32
    return %c0_i32, %c0_i32_0 : i32, i32
  }
  func.func @transform_9(%arg0: i32) -> (i32, i32) {
    %c0_i32 = arith.constant 0 : i32
    %c0_i32_0 = arith.constant 0 : i32
    %c0_i32_1 = arith.constant 0 : i32
    return %c0_i32, %c0_i32_0 : i32, i32
  }
  func.func @transform_10(%arg0: i32) -> (i32, i32) {
    %c0_i32 = arith.constant 0 : i32
    %c0_i32_0 = arith.constant 0 : i32
    %c0_i32_1 = arith.constant 0 : i32
    return %c0_i32, %c0_i32_0 : i32, i32
  }
  func.func @transform_11(%arg0: i32) -> (i32, i32) {
    %c0_i32 = arith.constant 0 : i32
    %c0_i32_0 = arith.constant 0 : i32
    %c0_i32_1 = arith.constant 0 : i32
    return %c0_i32, %c0_i32_0 : i32, i32
  }
  func.func @transform_12(%arg0: i32) -> (i32, i32) {
    %c0_i32 = arith.constant 0 : i32
    %c0_i32_0 = arith.constant 0 : i32
    %c0_i32_1 = arith.constant 0 : i32
    return %c0_i32, %c0_i32_0 : i32, i32
  }
  func.func @transform_13(%arg0: i32) -> (i32, i32) {
    %c0_i32 = arith.constant 0 : i32
    %c0_i32_0 = arith.constant 0 : i32
    %c0_i32_1 = arith.constant 0 : i32
    return %c0_i32, %c0_i32_0 : i32, i32
  }
  func.func @transform_14(%arg0: i32) -> (i32, i32) {
    %c0_i32 = arith.constant 0 : i32
    %c0_i32_0 = arith.constant 0 : i32
    %c0_i32_1 = arith.constant 0 : i32
    return %c0_i32, %c0_i32_0 : i32, i32
  }
  func.func @transform_15(%arg0: i32) -> (i32, i32) {
    %c0_i32 = arith.constant 0 : i32
    %c0_i32_0 = arith.constant 0 : i32
    return %arg0, %c0_i32 : i32, i32
  }
}

</mosaic_0001>

<llo_original>
// kernel: tpu_custom_call.1
$region0: #{tpu_custom_call.1}
  #allocation0 [shape = 'u32[]', space=smem, size = 0x4, offset = 0x4, fixed_abs, tag = 'smem constant byte address 0x4 - core index']
  #allocation1 [shape = 'u32[144,128]{1,0:T(1,128)}', space=vmem, size = 0x12000, scoped, tag = 'internal scratch']
  %s0 = inlined_call_operand.vmem [shape: f32[3,192], index: 0, kind: input, shape index: {}]
  %s1 = inlined_call_operand.hbm [shape: f32[3,64], index: 1, kind: input, shape index: {}]
  %s2 = inlined_call_operand.hbm [shape: bf16[192,256], index: 2, kind: input, shape index: {}]
  %s3 = inlined_call_operand.vmem [shape: f32[1,256], index: 3, kind: input, shape index: {}]
  %s4 = inlined_call_operand.vmem [shape: bf16[256,256], index: 4, kind: input, shape index: {}]
  %s5 = inlined_call_operand.vmem [shape: f32[1,256], index: 5, kind: input, shape index: {}]
  %s6 = inlined_call_operand.hbm [shape: bf16[256,640], index: 6, kind: input, shape index: {}]
  %s7 = inlined_call_operand.vmem [shape: f32[1,640], index: 7, kind: input, shape index: {}]
  %s8 = inlined_call_operand.vmem [shape: bf16[256,256], index: 8, kind: input, shape index: {}]
  %s9 = inlined_call_operand.vmem [shape: f32[1,256], index: 9, kind: input, shape index: {}]
  %s10 = inlined_call_operand.hbm [shape: bf16[64,640], index: 10, kind: input, shape index: {}]
  %s11 = inlined_call_operand.vmem [shape: bf16[640,80], index: 11, kind: input, shape index: {}]
  %s12 = inlined_call_operand.hbm [shape: bf16[80,256], index: 12, kind: input, shape index: {}]
  %s13 = inlined_call_operand.hbm [shape: bf16[256,256], index: 13, kind: input, shape index: {}]
  %s14 = inlined_call_operand.vmem [shape: f32[1,256], index: 14, kind: input, shape index: {}]
  %s15 = inlined_call_operand.hbm [shape: f32[3,256], index: 15, kind: output, shape index: {}]
  %s16 = sld [smem:[#allocation0]]
  $region94: #{tpu_custom_call.1} parent=0
    _
  %s18 = ssub.s32 1, %s16
  %s19 = scalar_select 0, %s18, %s16
  $region1: #{tpu_custom_call.1} parent=0
    #allocation2 [shape = 'u8[2048]{0}', space=vmem, size = 0x800, scoped, tag = 'input window, operand 1, single buffered']
    #allocation3 [shape = 's32[1]{0}', space=sflag, size = 0x4, scoped, tag = 'scoped memory for tpu_custom_call.1']
    #allocation4 [shape = 's32[1]{0}', space=sflag, size = 0x4, scoped, tag = 'scoped memory for tpu_custom_call.1']
    #allocation5 [shape = 'u8[98304]{0}', space=vmem, size = 0x18000, scoped, tag = 'input window, operand 2, single buffered']
    #allocation6 [shape = 's32[1]{0}', space=sflag, size = 0x4, scoped, tag = 'scoped memory for tpu_custom_call.1']
    #allocation7 [shape = 'u8[327680]{0}', space=vmem, size = 0x50000, scoped, tag = 'input window, operand 6, single buffered']
    #allocation8 [shape = 'u8[81920]{0}', space=vmem, size = 0x14000, scoped, tag = 'input window, operand 10, single buffered']
    #allocation9 [shape = 's32[1]{0}', space=sflag, size = 0x4, scoped, tag = 'scoped memory for tpu_custom_call.1']
    #allocation10 [shape = 'u8[40960]{0}', space=vmem, size = 0xa000, scoped, tag = 'input window, operand 12, single buffered']
    #allocation11 [shape = 'u8[131072]{0}', space=vmem, size = 0x20000, scoped, tag = 'input window, operand 13, single buffered']
    #allocation12 [shape = 's32[1]{0}', space=sflag, size = 0x4, scoped, tag = 'scoped memory for tpu_custom_call.1']
    #allocation13 [shape = 'u8[4096]{0}', space=vmem, size = 0x1000, scoped, tag = 'output window, operand 0, single buffered']
    %20 = vsyncpa [#allocation3], 0
    %21 = vsyncpa [#allocation6], 0
    %22 = vsyncpa [#allocation9], 0
    %23 = vsyncpa [#allocation12], 0
    %24 = vsyncpa [#allocation4], 0
    // Predicated region
    $region2: #{tpu_custom_call.1} parent=1 // pred_check
      _
    $region3: #{tpu_custom_call.1} parent=1 // pred_check_branch
      %26 = sbr.rel (0) target = $region5
    $region4: #{tpu_custom_call.1} parent=1 // pred_region
      _
    $region5: #{tpu_custom_call.1} parent=1 // pred_fallthru
      _
    // Predicated region
    $region6: #{tpu_custom_call.1} parent=1 // pred_check
      _
    $region7: #{tpu_custom_call.1} parent=1 // pred_check_branch
      %28 = sbr.rel (0) target = $region9
    $region8: #{tpu_custom_call.1} parent=1 // pred_region
      %s30 = ssub.s32 64, 64
      %31 = vsyncadd [#allocation3], %s30
      %s33 = sshll.u32 [#allocation2], 4
      %s34 = int_to_ptr.vmem [resolvable:$true] %s33
      %36 = dma.hbm_to_vmem [thread:$0]  %s1, 64, %s34, [#allocation3]
    $region9: #{tpu_custom_call.1} parent=1 // pred_fallthru
      _
    // Predicated region
    $region10: #{tpu_custom_call.1} parent=1 // pred_check
      _
    $region11: #{tpu_custom_call.1} parent=1 // pred_check_branch
      %38 = sbr.rel (0) target = $region13
    $region12: #{tpu_custom_call.1} parent=1 // pred_region
      %s40 = ssub.s32 3072, 3072
      %41 = vsyncadd [#allocation6], %s40
      %s42 = sshll.u32 [#allocation5], 4
      %s43 = int_to_ptr.vmem [resolvable:$true] %s42
      %48 = dma.hbm_to_vmem [thread:$0]  %s2, 3072, %s43, [#allocation6], 128, 128, 8
    $region13: #{tpu_custom_call.1} parent=1 // pred_fallthru
      _
    // Predicated region
    $region14: #{tpu_custom_call.1} parent=1 // pred_check
      _
    $region15: #{tpu_custom_call.1} parent=1 // pred_check_branch
      %50 = sbr.rel (0) target = $region17
    $region16: #{tpu_custom_call.1} parent=1 // pred_region
      _
    $region17: #{tpu_custom_call.1} parent=1 // pred_fallthru
      _
    // Predicated region
    $region18: #{tpu_custom_call.1} parent=1 // pred_check
      _
    $region19: #{tpu_custom_call.1} parent=1 // pred_check_branch
      %52 = sbr.rel (0) target = $region21
    $region20: #{tpu_custom_call.1} parent=1 // pred_region
      _
    $region21: #{tpu_custom_call.1} parent=1 // pred_fallthru
      _
    // Predicated region
    $region22: #{tpu_custom_call.1} parent=1 // pred_check
      _
    $region23: #{tpu_custom_call.1} parent=1 // pred_check_branch
      %54 = sbr.rel (0) target = $region25
    $region24: #{tpu_custom_call.1} parent=1 // pred_region
      _
    $region25: #{tpu_custom_call.1} parent=1 // pred_fallthru
      _
    // Predicated region
    $region26: #{tpu_custom_call.1} parent=1 // pred_check
      _
    $region27: #{tpu_custom_call.1} parent=1 // pred_check_branch
      %56 = sbr.rel (0) target = $region29
    $region28: #{tpu_custom_call.1} parent=1 // pred_region
      %s58 = ssub.s32 10240, 10240
      %59 = vsyncadd [#allocation6], %s58
      %s60 = sshll.u32 [#allocation7], 4
      %s61 = int_to_ptr.vmem [resolvable:$true] %s60
      %66 = dma.hbm_to_vmem [thread:$0]  %s6, 10240, %s61, [#allocation6], 320, 320, 20
    $region29: #{tpu_custom_call.1} parent=1 // pred_fallthru
      _
    // Predicated region
    $region30: #{tpu_custom_call.1} parent=1 // pred_check
      _
    $region31: #{tpu_custom_call.1} parent=1 // pred_check_branch
      %68 = sbr.rel (0) target = $region33
    $region32: #{tpu_custom_call.1} parent=1 // pred_region
      _
    $region33: #{tpu_custom_call.1} parent=1 // pred_fallthru
      _
    // Predicated region
    $region34: #{tpu_custom_call.1} parent=1 // pred_check
      _
    $region35: #{tpu_custom_call.1} parent=1 // pred_check_branch
      %70 = sbr.rel (0) target = $region37
    $region36: #{tpu_custom_call.1} parent=1 // pred_region
      _
    $region37: #{tpu_custom_call.1} parent=1 // pred_fallthru
      _
    // Predicated region
    $region38: #{tpu_custom_call.1} parent=1 // pred_check
      _
    $region39: #{tpu_custom_call.1} parent=1 // pred_check_branch
      %72 = sbr.rel (0) target = $region41
    $region40: #{tpu_custom_call.1} parent=1 // pred_region
      _
    $region41: #{tpu_custom_call.1} parent=1 // pred_fallthru
      _
    // Predicated region
    $region42: #{tpu_custom_call.1} parent=1 // pred_check
      _
    $region43: #{tpu_custom_call.1} parent=1 // pred_check_branch
      %74 = sbr.rel (0) target = $region45
    $region44: #{tpu_custom_call.1} parent=1 // pred_region
      %s76 = ssub.s32 2560, 2560
      %77 = vsyncadd [#allocation9], %s76
      %s78 = sshll.u32 [#allocation8], 4
      %s79 = int_to_ptr.vmem [resolvable:$true] %s78
      %84 = dma.hbm_to_vmem [thread:$0]  %s10, 2560, %s79, [#allocation9], 320, 320, 20
    $region45: #{tpu_custom_call.1} parent=1 // pred_fallthru
      _
    // Predicated region
    $region46: #{tpu_custom_call.1} parent=1 // pred_check
      _
    $region47: #{tpu_custom_call.1} parent=1 // pred_check_branch
      %86 = sbr.rel (0) target = $region49
    $region48: #{tpu_custom_call.1} parent=1 // pred_region
      _
    $region49: #{tpu_custom_call.1} parent=1 // pred_fallthru
      _
    // Predicated region
    $region50: #{tpu_custom_call.1} parent=1 // pred_check
      _
    $region51: #{tpu_custom_call.1} parent=1 // pred_check_branch
      %88 = sbr.rel (0) target = $region53
    $region52: #{tpu_custom_call.1} parent=1 // pred_region
      %s90 = ssub.s32 1280, 1280
      %91 = vsyncadd [#allocation9], %s90
      %s92 = sshll.u32 [#allocation10], 4
      %s93 = int_to_ptr.vmem [resolvable:$true] %s92
      %98 = dma.hbm_to_vmem [thread:$0]  %s12, 1280, %s93, [#allocation9], 128, 128, 8
    $region53: #{tpu_custom_call.1} parent=1 // pred_fallthru
      _
    // Predicated region
    $region54: #{tpu_custom_call.1} parent=1 // pred_check
      _
    $region55: #{tpu_custom_call.1} parent=1 // pred_check_branch
      %100 = sbr.rel (0) target = $region57
    $region56: #{tpu_custom_call.1} parent=1 // pred_region
      %s102 = ssub.s32 4096, 4096
      %103 = vsyncadd [#allocation12], %s102
      %s104 = sshll.u32 [#allocation11], 4
      %s105 = int_to_ptr.vmem [resolvable:$true] %s104
      %110 = dma.hbm_to_vmem [thread:$0]  %s13, 4096, %s105, [#allocation12], 128, 128, 8
    $region57: #{tpu_custom_call.1} parent=1 // pred_fallthru
      _
    // Predicated region
    $region58: #{tpu_custom_call.1} parent=1 // pred_check
      _
    $region59: #{tpu_custom_call.1} parent=1 // pred_check_branch
      %112 = sbr.rel (0) target = $region61
    $region60: #{tpu_custom_call.1} parent=1 // pred_region
      _
    $region61: #{tpu_custom_call.1} parent=1 // pred_fallthru
      _
    // Predicated region
    $region62: #{tpu_custom_call.1} parent=1 // pred_check
      _
    $region63: #{tpu_custom_call.1} parent=1 // pred_check_branch
      %114 = sbr.rel (0) target = $region65
    $region64: #{tpu_custom_call.1} parent=1 // pred_region
      %115 = dma.done [#allocation3], 64
    $region65: #{tpu_custom_call.1} parent=1 // pred_fallthru
      _
    // Predicated region
    $region66: #{tpu_custom_call.1} parent=1 // pred_check
      _
    $region67: #{tpu_custom_call.1} parent=1 // pred_check_branch
      %117 = sbr.rel (0) target = $region69
    $region68: #{tpu_custom_call.1} parent=1 // pred_region
      %118 = dma.done [#allocation6], 3072
    $region69: #{tpu_custom_call.1} parent=1 // pred_fallthru
      _
    // Predicated region
    $region70: #{tpu_custom_call.1} parent=1 // pred_check
      _
    $region71: #{tpu_custom_call.1} parent=1 // pred_check_branch
      %120 = sbr.rel (0) target = $region73
    $region72: #{tpu_custom_call.1} parent=1 // pred_region
      %121 = dma.done [#allocation6], 10240
    $region73: #{tpu_custom_call.1} parent=1 // pred_fallthru
      _
    // Predicated region
    $region74: #{tpu_custom_call.1} parent=1 // pred_check
      _
    $region75: #{tpu_custom_call.1} parent=1 // pred_check_branch
      %123 = sbr.rel (0) target = $region77
    $region76: #{tpu_custom_call.1} parent=1 // pred_region
      %124 = dma.done [#allocation9], 2560
    $region77: #{tpu_custom_call.1} parent=1 // pred_fallthru
      _
    // Predicated region
    $region78: #{tpu_custom_call.1} parent=1 // pred_check
      _
    $region79: #{tpu_custom_call.1} parent=1 // pred_check_branch
      %126 = sbr.rel (0) target = $region81
    $region80: #{tpu_custom_call.1} parent=1 // pred_region
      %127 = dma.done [#allocation9], 1280
    $region81: #{tpu_custom_call.1} parent=1 // pred_fallthru
      _
    // Predicated region
    $region82: #{tpu_custom_call.1} parent=1 // pred_check
      _
    $region83: #{tpu_custom_call.1} parent=1 // pred_check_branch
      %129 = sbr.rel (0) target = $region85
    $region84: #{tpu_custom_call.1} parent=1 // pred_region
      %130 = dma.done [#allocation12], 4096
    $region85: #{tpu_custom_call.1} parent=1 // pred_fallthru
      _
    %v132 = vld [vmem:[%s0] sm:$0x77]
    %v134 = vcombine.high %v132, %v132
    %v136 = vpack.c.bf16 %v132, %v132
    %v137 = vpack.c.bf16 %v134, %v134
    %v138 = vld [vmem:[#allocation5] sm:$0xff]
    %v139 = vld [vmem:[#allocation5 + $0x8] sm:$0xff]
    %v140 = vld [vmem:[#allocation5 + $0x10] sm:$0xff]
    %v141 = vld [vmem:[#allocation5 + $0x18] sm:$0xff]
    %v142 = vld [vmem:[#allocation5 + $0x20] sm:$0xff]
    %v143 = vld [vmem:[#allocation5 + $0x28] sm:$0xff]
    %v144 = vld [vmem:[#allocation5 + $0x30] sm:$0xff]
    %v145 = vld [vmem:[#allocation5 + $0x38] sm:$0xff]
    %v146 = vld [vmem:[#allocation5 + $0x40] sm:$0xff]
    %v147 = vld [vmem:[#allocation5 + $0x48] sm:$0xff]
    %v148 = vld [vmem:[#allocation5 + $0x50] sm:$0xff]
    %v149 = vld [vmem:[#allocation5 + $0x58] sm:$0xff]
    %v150 = vld [vmem:[#allocation5 + $0x60] sm:$0xff]
    %v151 = vld [vmem:[#allocation5 + $0x68] sm:$0xff]
    %v152 = vld [vmem:[#allocation5 + $0x70] sm:$0xff]
    %v153 = vld [vmem:[#allocation5 + $0x78] sm:$0xff]
    %v154 = vld [vmem:[#allocation5 + $0x80] sm:$0xff]
    %v155 = vld [vmem:[#allocation5 + $0x88] sm:$0xff]
    %v156 = vld [vmem:[#allocation5 + $0x90] sm:$0xff]
    %v157 = vld [vmem:[#allocation5 + $0x98] sm:$0xff]
    %v158 = vld [vmem:[#allocation5 + $0xa0] sm:$0xff]
    %v159 = vld [vmem:[#allocation5 + $0xa8] sm:$0xff]
    %v160 = vld [vmem:[#allocation5 + $0xb0] sm:$0xff]
    %v161 = vld [vmem:[#allocation5 + $0xb8] sm:$0xff]
    %v162 = vld [vmem:[%s3] sm:$0x3]
    %v164 = vlaneseq
    %v165 = vshrl.u32 %v164, 7
    %v166 = vsub.s32 0, %v165
    %v167 = vrot.slane %v162, %v166
    %v168 = vlaneseq
    %v169 = vshrl.u32 %v168, 7
    %v170 = vsub.s32 1, %v169
    %v171 = vrot.slane %v162, %v170
    %v198 = vunpack.c.l.b16 %v138
    %v199 = vunpack.c.h.b16 %v138
    %v200 = vunpack.c.l.b16 %v139
    %v201 = vunpack.c.h.b16 %v139
    %v202 = vunpack.c.l.b16 %v140
    %v203 = vunpack.c.h.b16 %v140
    %v204 = vunpack.c.l.b16 %v141
    %v205 = vunpack.c.h.b16 %v141
    %v206 = vunpack.c.l.b16 %v142
    %v207 = vunpack.c.h.b16 %v142
    %v208 = vunpack.c.l.b16 %v143
    %v209 = vunpack.c.h.b16 %v143
    %v210 = vunpack.c.l.b16 %v144
    %v211 = vunpack.c.h.b16 %v144
    %v212 = vunpack.c.l.b16 %v145
    %v213 = vunpack.c.h.b16 %v145
    %v214 = vunpack.c.l.b16 %v146
    %v215 = vunpack.c.h.b16 %v146
    %v216 = vunpack.c.l.b16 %v147
    %v217 = vunpack.c.h.b16 %v147
    %v218 = vunpack.c.l.b16 %v148
    %v219 = vunpack.c.h.b16 %v148
    %v220 = vunpack.c.l.b16 %v149
    %v221 = vunpack.c.h.b16 %v149
    %v222 = vunpack.c.l.b16 %v150
    %v223 = vunpack.c.h.b16 %v150
    %v224 = vunpack.c.l.b16 %v151
    %v225 = vunpack.c.h.b16 %v151
    %v226 = vunpack.c.l.b16 %v152
    %v227 = vunpack.c.h.b16 %v152
    %v228 = vunpack.c.l.b16 %v153
    %v229 = vunpack.c.h.b16 %v153
    %v230 = vunpack.c.l.b16 %v154
    %v231 = vunpack.c.h.b16 %v154
    %v232 = vunpack.c.l.b16 %v155
    %v233 = vunpack.c.h.b16 %v155
    %v234 = vunpack.c.l.b16 %v156
    %v235 = vunpack.c.h.b16 %v156
    %v236 = vunpack.c.l.b16 %v157
    %v237 = vunpack.c.h.b16 %v157
    %v238 = vunpack.c.l.b16 %v158
    %v239 = vunpack.c.h.b16 %v158
    %v240 = vunpack.c.l.b16 %v159
    %v241 = vunpack.c.h.b16 %v159
    %v242 = vunpack.c.l.b16 %v160
    %v243 = vunpack.c.h.b16 %v160
    %v244 = vunpack.c.l.b16 %v161
    %v245 = vunpack.c.h.b16 %v161
    %v246 = vpack.c.b16 %v200, %v198
    %v247 = vpack.c.b16 %v201, %v199
    %v248 = vpack.c.b16 %v204, %v202
    %v249 = vpack.c.b16 %v205, %v203
    %v250 = vpack.c.b16 %v208, %v206
    %v251 = vpack.c.b16 %v209, %v207
    %v252 = vpack.c.b16 %v212, %v210
    %v253 = vpack.c.b16 %v213, %v211
    %v254 = vpack.c.b16 %v216, %v214
    %v255 = vpack.c.b16 %v217, %v215
    %v256 = vpack.c.b16 %v220, %v218
    %v257 = vpack.c.b16 %v221, %v219
    %v258 = vpack.c.b16 %v224, %v222
    %v259 = vpack.c.b16 %v225, %v223
    %v260 = vpack.c.b16 %v228, %v226
    %v261 = vpack.c.b16 %v229, %v227
    %v262 = vpack.c.b16 %v232, %v230
    %v263 = vpack.c.b16 %v233, %v231
    %v264 = vpack.c.b16 %v236, %v234
    %v265 = vpack.c.b16 %v237, %v235
    %v266 = vpack.c.b16 %v240, %v238
    %v267 = vpack.c.b16 %v241, %v239
    %v268 = vpack.c.b16 %v244, %v242
    %v269 = vpack.c.b16 %v245, %v243
    %vm294 = vcmask 523264
    %v296 = vsel %vm294, %v137, 0
    %298 = vmatprep.subr.bf16.mxu0 %v247
    %299 = vmatpush1.bf16.msra.mxu0 %v246
    %300 = vmatprep.subr.bf16.mxu0 %v249
    %301 = vmatpush1.bf16.msra.mxu0 %v248
    %302 = vmatprep.subr.bf16.mxu0 %v251
    %303 = vmatpush1.bf16.msra.mxu0 %v250
    %304 = vmatprep.subr.bf16.mxu0 %v253
    %305 = vmatpush1.bf16.msra.mxu0 %v252
    %306 = vmatprep.subr.bf16.mxu0 %v255
    %307 = vmatpush1.bf16.msra.mxu0 %v254
    %308 = vmatprep.subr.bf16.mxu0 %v257
    %309 = vmatpush1.bf16.msra.mxu0 %v256
    %310 = vmatprep.subr.bf16.mxu0 %v259
    %311 = vmatpush1.bf16.msra.mxu0 %v258
    %312 = vmatprep.subr.bf16.mxu0 %v261
    %313 = vmatpush1.bf16.msra.mxu0 %v260
    %314 = vmatprep.subr.bf16.mxu0 %v263
    %315 = vmatpush1.bf16.msra.mxu0 %v262
    %316 = vmatprep.subr.bf16.mxu0 %v265
    %317 = vmatpush1.bf16.msra.mxu0 %v264
    %318 = vmatprep.subr.bf16.mxu0 %v267
    %319 = vmatpush1.bf16.msra.mxu0 %v266
    %320 = vmatprep.subr.bf16.mxu0 %v269
    %321 = vmatpush1.bf16.msra.mxu0 %v268
    %322 = vmatprep.subr.bf16.mxu0 0
    %323 = vmatpush1.bf16.msra.mxu0 0
    %324 = vmatprep.subr.bf16.mxu0 0
    %325 = vmatpush1.bf16.msra.mxu0 0
    %326 = vmatprep.subr.bf16.mxu0 0
    %327 = vmatpush1.bf16.msra.mxu0 0
    %328 = vmatprep.subr.bf16.mxu0 0
    %329 = vmatpush1.bf16.msra.mxu0 0
    %330 = vmatprep.mubr.bf16.mxu0 %v296
    %331 = vmatmul.mubr.bf16.gmra.mrb[0].mxu0 %v136
    %v332 = vpop.f32.mrb[0].mxu0
    %v333 = vadd.f32 %v167, %v332
    %v334 = vpop.f32.mrb[0].mxu0
    %v335 = vadd.f32 %v171, %v334
    %v336 = vpop.f32.mrb[0].mxu0
    %v337 = vpop.f32.mrb[0].mxu0
    %338 = vdwg.mxu0
    %v339 = vmul.f32 %v333, 0.01
    %v340 = vmul.f32 %v335, 0.01
    %v341 = vmax.f32 %v333, %v339
    %v342 = vmax.f32 %v335, %v340
    %v343 = vpack.c.bf16 %v341, %v341
    %v344 = vpack.c.bf16 %v342, %v342
    %v345 = vld [vmem:[%s4] sm:$0xff]
    %v346 = vld [vmem:[%s4 + $0x8] sm:$0xff]
    %v347 = vld [vmem:[%s4 + $0x10] sm:$0xff]
    %v348 = vld [vmem:[%s4 + $0x18] sm:$0xff]
    %v349 = vld [vmem:[%s4 + $0x20] sm:$0xff]
    %v350 = vld [vmem:[%s4 + $0x28] sm:$0xff]
    %v351 = vld [vmem:[%s4 + $0x30] sm:$0xff]
    %v352 = vld [vmem:[%s4 + $0x38] sm:$0xff]
    %v353 = vld [vmem:[%s4 + $0x40] sm:$0xff]
    %v354 = vld [vmem:[%s4 + $0x48] sm:$0xff]
    %v355 = vld [vmem:[%s4 + $0x50] sm:$0xff]
    %v356 = vld [vmem:[%s4 + $0x58] sm:$0xff]
    %v357 = vld [vmem:[%s4 + $0x60] sm:$0xff]
    %v358 = vld [vmem:[%s4 + $0x68] sm:$0xff]
    %v359 = vld [vmem:[%s4 + $0x70] sm:$0xff]
    %v360 = vld [vmem:[%s4 + $0x78] sm:$0xff]
    %v361 = vld [vmem:[%s4 + $0x80] sm:$0xff]
    %v362 = vld [vmem:[%s4 + $0x88] sm:$0xff]
    %v363 = vld [vmem:[%s4 + $0x90] sm:$0xff]
    %v364 = vld [vmem:[%s4 + $0x98] sm:$0xff]
    %v365 = vld [vmem:[%s4 + $0xa0] sm:$0xff]
    %v366 = vld [vmem:[%s4 + $0xa8] sm:$0xff]
    %v367 = vld [vmem:[%s4 + $0xb0] sm:$0xff]
    %v368 = vld [vmem:[%s4 + $0xb8] sm:$0xff]
    %v369 = vld [vmem:[%s4 + $0xc0] sm:$0xff]
    %v370 = vld [vmem:[%s4 + $0xc8] sm:$0xff]
    %v371 = vld [vmem:[%s4 + $0xd0] sm:$0xff]
    %v372 = vld [vmem:[%s4 + $0xd8] sm:$0xff]
    %v373 = vld [vmem:[%s4 + $0xe0] sm:$0xff]
    %v374 = vld [vmem:[%s4 + $0xe8] sm:$0xff]
    %v375 = vld [vmem:[%s4 + $0xf0] sm:$0xff]
    %v376 = vld [vmem:[%s4 + $0xf8] sm:$0xff]
    %v377 = vld [vmem:[%s5] sm:$0x3]
    %v379 = vlaneseq
    %v380 = vshrl.u32 %v379, 7
    %v381 = vsub.s32 0, %v380
    %v382 = vrot.slane %v377, %v381
    %v383 = vlaneseq
    %v384 = vshrl.u32 %v383, 7
    %v385 = vsub.s32 1, %v384
    %v386 = vrot.slane %v377, %v385
    %v421 = vunpack.c.l.b16 %v345
    %v422 = vunpack.c.h.b16 %v345
    %v423 = vunpack.c.l.b16 %v346
    %v424 = vunpack.c.h.b16 %v346
    %v425 = vunpack.c.l.b16 %v347
    %v426 = vunpack.c.h.b16 %v347
    %v427 = vunpack.c.l.b16 %v348
    %v428 = vunpack.c.h.b16 %v348
    %v429 = vunpack.c.l.b16 %v349
    %v430 = vunpack.c.h.b16 %v349
    %v431 = vunpack.c.l.b16 %v350
    %v432 = vunpack.c.h.b16 %v350
    %v433 = vunpack.c.l.b16 %v351
    %v434 = vunpack.c.h.b16 %v351
    %v435 = vunpack.c.l.b16 %v352
    %v436 = vunpack.c.h.b16 %v352
    %v437 = vunpack.c.l.b16 %v353
    %v438 = vunpack.c.h.b16 %v353
    %v439 = vunpack.c.l.b16 %v354
    %v440 = vunpack.c.h.b16 %v354
    %v441 = vunpack.c.l.b16 %v355
    %v442 = vunpack.c.h.b16 %v355
    %v443 = vunpack.c.l.b16 %v356
    %v444 = vunpack.c.h.b16 %v356
    %v445 = vunpack.c.l.b16 %v357
    %v446 = vunpack.c.h.b16 %v357
    %v447 = vunpack.c.l.b16 %v358
    %v448 = vunpack.c.h.b16 %v358
    %v449 = vunpack.c.l.b16 %v359
    %v450 = vunpack.c.h.b16 %v359
    %v451 = vunpack.c.l.b16 %v360
    %v452 = vunpack.c.h.b16 %v360
    %v453 = vunpack.c.l.b16 %v361
    %v454 = vunpack.c.h.b16 %v361
    %v455 = vunpack.c.l.b16 %v362
    %v456 = vunpack.c.h.b16 %v362
    %v457 = vunpack.c.l.b16 %v363
    %v458 = vunpack.c.h.b16 %v363
    %v459 = vunpack.c.l.b16 %v364
    %v460 = vunpack.c.h.b16 %v364
    %v461 = vunpack.c.l.b16 %v365
    %v462 = vunpack.c.h.b16 %v365
    %v463 = vunpack.c.l.b16 %v366
    %v464 = vunpack.c.h.b16 %v366
    %v465 = vunpack.c.l.b16 %v367
    %v466 = vunpack.c.h.b16 %v367
    %v467 = vunpack.c.l.b16 %v368
    %v468 = vunpack.c.h.b16 %v368
    %v469 = vunpack.c.l.b16 %v369
    %v470 = vunpack.c.h.b16 %v369
    %v471 = vunpack.c.l.b16 %v370
    %v472 = vunpack.c.h.b16 %v370
    %v473 = vunpack.c.l.b16 %v371
    %v474 = vunpack.c.h.b16 %v371
    %v475 = vunpack.c.l.b16 %v372
    %v476 = vunpack.c.h.b16 %v372
    %v477 = vunpack.c.l.b16 %v373
    %v478 = vunpack.c.h.b16 %v373
    %v479 = vunpack.c.l.b16 %v374
    %v480 = vunpack.c.h.b16 %v374
    %v481 = vunpack.c.l.b16 %v375
    %v482 = vunpack.c.h.b16 %v375
    %v483 = vunpack.c.l.b16 %v376
    %v484 = vunpack.c.h.b16 %v376
    %v485 = vpack.c.b16 %v423, %v421
    %v486 = vpack.c.b16 %v424, %v422
    %v487 = vpack.c.b16 %v427, %v425
    %v488 = vpack.c.b16 %v428, %v426
    %v489 = vpack.c.b16 %v431, %v429
    %v490 = vpack.c.b16 %v432, %v430
    %v491 = vpack.c.b16 %v435, %v433
    %v492 = vpack.c.b16 %v436, %v434
    %v493 = vpack.c.b16 %v439, %v437
    %v494 = vpack.c.b16 %v440, %v438
    %v495 = vpack.c.b16 %v443, %v441
    %v496 = vpack.c.b16 %v444, %v442
    %v497 = vpack.c.b16 %v447, %v445
    %v498 = vpack.c.b16 %v448, %v446
    %v499 = vpack.c.b16 %v451, %v449
    %v500 = vpack.c.b16 %v452, %v450
    %v501 = vpack.c.b16 %v455, %v453
    %v502 = vpack.c.b16 %v456, %v454
    %v503 = vpack.c.b16 %v459, %v457
    %v504 = vpack.c.b16 %v460, %v458
    %v505 = vpack.c.b16 %v463, %v461
    %v506 = vpack.c.b16 %v464, %v462
    %v507 = vpack.c.b16 %v467, %v465
    %v508 = vpack.c.b16 %v468, %v466
    %v509 = vpack.c.b16 %v471, %v469
    %v510 = vpack.c.b16 %v472, %v470
    %v511 = vpack.c.b16 %v475, %v473
    %v512 = vpack.c.b16 %v476, %v474
    %v513 = vpack.c.b16 %v479, %v477
    %v514 = vpack.c.b16 %v480, %v478
    %v515 = vpack.c.b16 %v483, %v481
    %v516 = vpack.c.b16 %v484, %v482
    %549 = vmatprep.subr.bf16.mxu0 %v486
    %550 = vmatpush1.bf16.msra.mxu0 %v485
    %551 = vmatprep.subr.bf16.mxu0 %v488
    %552 = vmatpush1.bf16.msra.mxu0 %v487
    %553 = vmatprep.subr.bf16.mxu0 %v490
    %554 = vmatpush1.bf16.msra.mxu0 %v489
    %555 = vmatprep.subr.bf16.mxu0 %v492
    %556 = vmatpush1.bf16.msra.mxu0 %v491
    %557 = vmatprep.subr.bf16.mxu0 %v494
    %558 = vmatpush1.bf16.msra.mxu0 %v493
    %559 = vmatprep.subr.bf16.mxu0 %v496
    %560 = vmatpush1.bf16.msra.mxu0 %v495
    %561 = vmatprep.subr.bf16.mxu0 %v498
    %562 = vmatpush1.bf16.msra.mxu0 %v497
    %563 = vmatprep.subr.bf16.mxu0 %v500
    %564 = vmatpush1.bf16.msra.mxu0 %v499
    %565 = vmatprep.subr.bf16.mxu0 %v502
    %566 = vmatpush1.bf16.msra.mxu0 %v501
    %567 = vmatprep.subr.bf16.mxu0 %v504
    %568 = vmatpush1.bf16.msra.mxu0 %v503
    %569 = vmatprep.subr.bf16.mxu0 %v506
    %570 = vmatpush1.bf16.msra.mxu0 %v505
    %571 = vmatprep.subr.bf16.mxu0 %v508
    %572 = vmatpush1.bf16.msra.mxu0 %v507
    %573 = vmatprep.subr.bf16.mxu0 %v510
    %574 = vmatpush1.bf16.msra.mxu0 %v509
    %575 = vmatprep.subr.bf16.mxu0 %v512
    %576 = vmatpush1.bf16.msra.mxu0 %v511
    %577 = vmatprep.subr.bf16.mxu0 %v514
    %578 = vmatpush1.bf16.msra.mxu0 %v513
    %579 = vmatprep.subr.bf16.mxu0 %v516
    %580 = vmatpush1.bf16.msra.mxu0 %v515
    %581 = vmatprep.mubr.bf16.mxu0 %v344
    %582 = vmatmul.mubr.bf16.gmra.mrb[0].mxu0 %v343
    %v583 = vpop.f32.mrb[0].mxu0
    %v584 = vadd.f32 %v382, %v583
    %v585 = vpop.f32.mrb[0].mxu0
    %v586 = vadd.f32 %v386, %v585
    %v587 = vpop.f32.mrb[0].mxu0
    %v588 = vpop.f32.mrb[0].mxu0
    %589 = vdwg.mxu0
    %v590 = vmul.f32 %v584, 0.01
    %v591 = vmul.f32 %v586, 0.01
    %v592 = vmax.f32 %v584, %v590
    %v593 = vmax.f32 %v586, %v591
    %v594 = vpack.c.bf16 %v592, %v592
    %v595 = vpack.c.bf16 %v593, %v593
    %v596 = vld [vmem:[#allocation7] sm:$0xff]
    %v597 = vld [vmem:[#allocation7 + $0x8] sm:$0xff]
    %v598 = vld [vmem:[#allocation7 + $0x10] sm:$0xf]
    %v599 = vld [vmem:[#allocation7 + $0x14] sm:$0xff]
    %v600 = vld [vmem:[#allocation7 + $0x1c] sm:$0xff]
    %v601 = vld [vmem:[#allocation7 + $0x24] sm:$0xf]
    %v602 = vld [vmem:[#allocation7 + $0x28] sm:$0xff]
    %v603 = vld [vmem:[#allocation7 + $0x30] sm:$0xff]
    %v604 = vld [vmem:[#allocation7 + $0x38] sm:$0xf]
    %v605 = vld [vmem:[#allocation7 + $0x3c] sm:$0xff]
    %v606 = vld [vmem:[#allocation7 + $0x44] sm:$0xff]
    %v607 = vld [vmem:[#allocation7 + $0x4c] sm:$0xf]
    %v608 = vld [vmem:[#allocation7 + $0x50] sm:$0xff]
    %v609 = vld [vmem:[#allocation7 + $0x58] sm:$0xff]
    %v610 = vld [vmem:[#allocation7 + $0x60] sm:$0xf]
    %v611 = vld [vmem:[#allocation7 + $0x64] sm:$0xff]
    %v612 = vld [vmem:[#allocation7 + $0x6c] sm:$0xff]
    %v613 = vld [vmem:[#allocation7 + $0x74] sm:$0xf]
    %v614 = vld [vmem:[#allocation7 + $0x78] sm:$0xff]
    %v615 = vld [vmem:[#allocation7 + $0x80] sm:$0xff]
    %v616 = vld [vmem:[#allocation7 + $0x88] sm:$0xf]
    %v617 = vld [vmem:[#allocation7 + $0x8c] sm:$0xff]
    %v618 = vld [vmem:[#allocation7 + $0x94] sm:$0xff]
    %v619 = vld [vmem:[#allocation7 + $0x9c] sm:$0xf]
    %v620 = vld [vmem:[#allocation7 + $0xa0] sm:$0xff]
    %v621 = vld [vmem:[#allocation7 + $0xa8] sm:$0xff]
    %v622 = vld [vmem:[#allocation7 + $0xb0] sm:$0xf]
    %v623 = vld [vmem:[#allocation7 + $0xb4] sm:$0xff]
    %v624 = vld [vmem:[#allocation7 + $0xbc] sm:$0xff]
    %v625 = vld [vmem:[#allocation7 + $0xc4] sm:$0xf]
    %v626 = vld [vmem:[#allocation7 + $0xc8] sm:$0xff]
    %v627 = vld [vmem:[#allocation7 + $0xd0] sm:$0xff]
    %v628 = vld [vmem:[#allocation7 + $0xd8] sm:$0xf]
    %v629 = vld [vmem:[#allocation7 + $0xdc] sm:$0xff]
    %v630 = vld [vmem:[#allocation7 + $0xe4] sm:$0xff]
    %v631 = vld [vmem:[#allocation7 + $0xec] sm:$0xf]
    %v632 = vld [vmem:[#allocation7 + $0xf0] sm:$0xff]
    %v633 = vld [vmem:[#allocation7 + $0xf8] sm:$0xff]
    %v634 = vld [vmem:[#allocation7 + $0x100] sm:$0xf]
    %v635 = vld [vmem:[#allocation7 + $0x104] sm:$0xff]
    %v636 = vld [vmem:[#allocation7 + $0x10c] sm:$0xff]
    %v637 = vld [vmem:[#allocation7 + $0x114] sm:$0xf]
    %v638 = vld [vmem:[#allocation7 + $0x118] sm:$0xff]
    %v639 = vld [vmem:[#allocation7 + $0x120] sm:$0xff]
    %v640 = vld [vmem:[#allocation7 + $0x128] sm:$0xf]
    %v641 = vld [vmem:[#allocation7 + $0x12c] sm:$0xff]
    %v642 = vld [vmem:[#allocation7 + $0x134] sm:$0xff]
    %v643 = vld [vmem:[#allocation7 + $0x13c] sm:$0xf]
    %v644 = vld [vmem:[#allocation7 + $0x140] sm:$0xff]
    %v645 = vld [vmem:[#allocation7 + $0x148] sm:$0xff]
    %v646 = vld [vmem:[#allocation7 + $0x150] sm:$0xf]
    %v647 = vld [vmem:[#allocation7 + $0x154] sm:$0xff]
    %v648 = vld [vmem:[#allocation7 + $0x15c] sm:$0xff]
    %v649 = vld [vmem:[#allocation7 + $0x164] sm:$0xf]
    %v650 = vld [vmem:[#allocation7 + $0x168] sm:$0xff]
    %v651 = vld [vmem:[#allocation7 + $0x170] sm:$0xff]
    %v652 = vld [vmem:[#allocation7 + $0x178] sm:$0xf]
    %v653 = vld [vmem:[#allocation7 + $0x17c] sm:$0xff]
    %v654 = vld [vmem:[#allocation7 + $0x184] sm:$0xff]
    %v655 = vld [vmem:[#allocation7 + $0x18c] sm:$0xf]
    %v656 = vld [vmem:[#allocation7 + $0x190] sm:$0xff]
    %v657 = vld [vmem:[#allocation7 + $0x198] sm:$0xff]
    %v658 = vld [vmem:[#allocation7 + $0x1a0] sm:$0xf]
    %v659 = vld [vmem:[#allocation7 + $0x1a4] sm:$0xff]
    %v660 = vld [vmem:[#allocation7 + $0x1ac] sm:$0xff]
    %v661 = vld [vmem:[#allocation7 + $0x1b4] sm:$0xf]
    %v662 = vld [vmem:[#allocation7 + $0x1b8] sm:$0xff]
    %v663 = vld [vmem:[#allocation7 + $0x1c0] sm:$0xff]
    %v664 = vld [vmem:[#allocation7 + $0x1c8] sm:$0xf]
    %v665 = vld [vmem:[#allocation7 + $0x1cc] sm:$0xff]
    %v666 = vld [vmem:[#allocation7 + $0x1d4] sm:$0xff]
    %v667 = vld [vmem:[#allocation7 + $0x1dc] sm:$0xf]
    %v668 = vld [vmem:[#allocation7 + $0x1e0] sm:$0xff]
    %v669 = vld [vmem:[#allocation7 + $0x1e8] sm:$0xff]
    %v670 = vld [vmem:[#allocation7 + $0x1f0] sm:$0xf]
    %v671 = vld [vmem:[#allocation7 + $0x1f4] sm:$0xff]
    %v672 = vld [vmem:[#allocation7 + $0x1fc] sm:$0xff]
    %v673 = vld [vmem:[#allocation7 + $0x204] sm:$0xf]
    %v674 = vld [vmem:[#allocation7 + $0x208] sm:$0xff]
    %v675 = vld [vmem:[#allocation7 + $0x210] sm:$0xff]
    %v676 = vld [vmem:[#allocation7 + $0x218] sm:$0xf]
    %v677 = vld [vmem:[#allocation7 + $0x21c] sm:$0xff]
    %v678 = vld [vmem:[#allocation7 + $0x224] sm:$0xff]
    %v679 = vld [vmem:[#allocation7 + $0x22c] sm:$0xf]
    %v680 = vld [vmem:[#allocation7 + $0x230] sm:$0xff]
    %v681 = vld [vmem:[#allocation7 + $0x238] sm:$0xff]
    %v682 = vld [vmem:[#allocation7 + $0x240] sm:$0xf]
    %v683 = vld [vmem:[#allocation7 + $0x244] sm:$0xff]
    %v684 = vld [vmem:[#allocation7 + $0x24c] sm:$0xff]
    %v685 = vld [vmem:[#allocation7 + $0x254] sm:$0xf]
    %v686 = vld [vmem:[#allocation7 + $0x258] sm:$0xff]
    %v687 = vld [vmem:[#allocation7 + $0x260] sm:$0xff]
    %v688 = vld [vmem:[#allocation7 + $0x268] sm:$0xf]
    %v689 = vld [vmem:[#allocation7 + $0x26c] sm:$0xff]
    %v690 = vld [vmem:[#allocation7 + $0x274] sm:$0xff]
    %v691 = vld [vmem:[#allocation7 + $0x27c] sm:$0xf]
    %v692 = vld [vmem:[%s7] sm:$0x1f]
    %v694 = vlaneseq
    %v695 = vshrl.u32 %v694, 7
    %v696 = vsub.s32 0, %v695
    %v697 = vrot.slane %v692, %v696
    %v698 = vlaneseq
    %v699 = vshrl.u32 %v698, 7
    %v700 = vsub.s32 1, %v699
    %v701 = vrot.slane %v692, %v700
    %v702 = vlaneseq
    %v703 = vshrl.u32 %v702, 7
    %v704 = vsub.s32 2, %v703
    %v705 = vrot.slane %v692, %v704
    %v706 = vlaneseq
    %v707 = vshrl.u32 %v706, 7
    %v708 = vsub.s32 3, %v707
    %v709 = vrot.slane %v692, %v708
    %v710 = vlaneseq
    %v711 = vshrl.u32 %v710, 7
    %v712 = vsub.s32 4, %v711
    %v713 = vrot.slane %v692, %v712
    %v815 = vunpack.c.l.b16 %v596
    %v816 = vunpack.c.h.b16 %v596
    %v817 = vunpack.c.l.b16 %v597
    %v818 = vunpack.c.h.b16 %v597
    %v819 = vunpack.c.l.b16 %v598
    %v820 = vunpack.c.l.b16 %v599
    %v821 = vunpack.c.h.b16 %v599
    %v822 = vunpack.c.l.b16 %v600
    %v823 = vunpack.c.h.b16 %v600
    %v824 = vunpack.c.l.b16 %v601
    %v825 = vunpack.c.l.b16 %v602
    %v826 = vunpack.c.h.b16 %v602
    %v827 = vunpack.c.l.b16 %v603
    %v828 = vunpack.c.h.b16 %v603
    %v829 = vunpack.c.l.b16 %v604
    %v830 = vunpack.c.l.b16 %v605
    %v831 = vunpack.c.h.b16 %v605
    %v832 = vunpack.c.l.b16 %v606
    %v833 = vunpack.c.h.b16 %v606
    %v834 = vunpack.c.l.b16 %v607
    %v835 = vunpack.c.l.b16 %v608
    %v836 = vunpack.c.h.b16 %v608
    %v837 = vunpack.c.l.b16 %v609
    %v838 = vunpack.c.h.b16 %v609
    %v839 = vunpack.c.l.b16 %v610
    %v840 = vunpack.c.l.b16 %v611
    %v841 = vunpack.c.h.b16 %v611
    %v842 = vunpack.c.l.b16 %v612
    %v843 = vunpack.c.h.b16 %v612
    %v844 = vunpack.c.l.b16 %v613
    %v845 = vunpack.c.l.b16 %v614
    %v846 = vunpack.c.h.b16 %v614
    %v847 = vunpack.c.l.b16 %v615
    %v848 = vunpack.c.h.b16 %v615
    %v849 = vunpack.c.l.b16 %v616
    %v850 = vunpack.c.l.b16 %v617
    %v851 = vunpack.c.h.b16 %v617
    %v852 = vunpack.c.l.b16 %v618
    %v853 = vunpack.c.h.b16 %v618
    %v854 = vunpack.c.l.b16 %v619
    %v855 = vunpack.c.l.b16 %v620
    %v856 = vunpack.c.h.b16 %v620
    %v857 = vunpack.c.l.b16 %v621
    %v858 = vunpack.c.h.b16 %v621
    %v859 = vunpack.c.l.b16 %v622
    %v860 = vunpack.c.l.b16 %v623
    %v861 = vunpack.c.h.b16 %v623
    %v862 = vunpack.c.l.b16 %v624
    %v863 = vunpack.c.h.b16 %v624
    %v864 = vunpack.c.l.b16 %v625
    %v865 = vunpack.c.l.b16 %v626
    %v866 = vunpack.c.h.b16 %v626
    %v867 = vunpack.c.l.b16 %v627
    %v868 = vunpack.c.h.b16 %v627
    %v869 = vunpack.c.l.b16 %v628
    %v870 = vunpack.c.l.b16 %v629
    %v871 = vunpack.c.h.b16 %v629
    %v872 = vunpack.c.l.b16 %v630
    %v873 = vunpack.c.h.b16 %v630
    %v874 = vunpack.c.l.b16 %v631
    %v875 = vunpack.c.l.b16 %v632
    %v876 = vunpack.c.h.b16 %v632
    %v877 = vunpack.c.l.b16 %v633
    %v878 = vunpack.c.h.b16 %v633
    %v879 = vunpack.c.l.b16 %v634
    %v880 = vunpack.c.l.b16 %v635
    %v881 = vunpack.c.h.b16 %v635
    %v882 = vunpack.c.l.b16 %v636
    %v883 = vunpack.c.h.b16 %v636
    %v884 = vunpack.c.l.b16 %v637
    %v885 = vunpack.c.l.b16 %v638
    %v886 = vunpack.c.h.b16 %v638
    %v887 = vunpack.c.l.b16 %v639
    %v888 = vunpack.c.h.b16 %v639
    %v889 = vunpack.c.l.b16 %v640
    %v890 = vunpack.c.l.b16 %v641
    %v891 = vunpack.c.h.b16 %v641
    %v892 = vunpack.c.l.b16 %v642
    %v893 = vunpack.c.h.b16 %v642
    %v894 = vunpack.c.l.b16 %v643
    %v895 = vunpack.c.l.b16 %v644
    %v896 = vunpack.c.h.b16 %v644
    %v897 = vunpack.c.l.b16 %v645
    %v898 = vunpack.c.h.b16 %v645
    %v899 = vunpack.c.l.b16 %v646
    %v900 = vunpack.c.l.b16 %v647
    %v901 = vunpack.c.h.b16 %v647
    %v902 = vunpack.c.l.b16 %v648
    %v903 = vunpack.c.h.b16 %v648
    %v904 = vunpack.c.l.b16 %v649
    %v905 = vunpack.c.l.b16 %v650
    %v906 = vunpack.c.h.b16 %v650
    %v907 = vunpack.c.l.b16 %v651
    %v908 = vunpack.c.h.b16 %v651
    %v909 = vunpack.c.l.b16 %v652
    %v910 = vunpack.c.l.b16 %v653
    %v911 = vunpack.c.h.b16 %v653
    %v912 = vunpack.c.l.b16 %v654
    %v913 = vunpack.c.h.b16 %v654
    %v914 = vunpack.c.l.b16 %v655
    %v915 = vunpack.c.l.b16 %v656
    %v916 = vunpack.c.h.b16 %v656
    %v917 = vunpack.c.l.b16 %v657
    %v918 = vunpack.c.h.b16 %v657
    %v919 = vunpack.c.l.b16 %v658
    %v920 = vunpack.c.l.b16 %v659
    %v921 = vunpack.c.h.b16 %v659
    %v922 = vunpack.c.l.b16 %v660
    %v923 = vunpack.c.h.b16 %v660
    %v924 = vunpack.c.l.b16 %v661
    %v925 = vunpack.c.l.b16 %v662
    %v926 = vunpack.c.h.b16 %v662
    %v927 = vunpack.c.l.b16 %v663
    %v928 = vunpack.c.h.b16 %v663
    %v929 = vunpack.c.l.b16 %v664
    %v930 = vunpack.c.l.b16 %v665
    %v931 = vunpack.c.h.b16 %v665
    %v932 = vunpack.c.l.b16 %v666
    %v933 = vunpack.c.h.b16 %v666
    %v934 = vunpack.c.l.b16 %v667
    %v935 = vunpack.c.l.b16 %v668
    %v936 = vunpack.c.h.b16 %v668
    %v937 = vunpack.c.l.b16 %v669
    %v938 = vunpack.c.h.b16 %v669
    %v939 = vunpack.c.l.b16 %v670
    %v940 = vunpack.c.l.b16 %v671
    %v941 = vunpack.c.h.b16 %v671
    %v942 = vunpack.c.l.b16 %v672
    %v943 = vunpack.c.h.b16 %v672
    %v944 = vunpack.c.l.b16 %v673
    %v945 = vunpack.c.l.b16 %v674
    %v946 = vunpack.c.h.b16 %v674
    %v947 = vunpack.c.l.b16 %v675
    %v948 = vunpack.c.h.b16 %v675
    %v949 = vunpack.c.l.b16 %v676
    %v950 = vunpack.c.l.b16 %v677
    %v951 = vunpack.c.h.b16 %v677
    %v952 = vunpack.c.l.b16 %v678
    %v953 = vunpack.c.h.b16 %v678
    %v954 = vunpack.c.l.b16 %v679
    %v955 = vunpack.c.l.b16 %v680
    %v956 = vunpack.c.h.b16 %v680
    %v957 = vunpack.c.l.b16 %v681
    %v958 = vunpack.c.h.b16 %v681
    %v959 = vunpack.c.l.b16 %v682
    %v960 = vunpack.c.l.b16 %v683
    %v961 = vunpack.c.h.b16 %v683
    %v962 = vunpack.c.l.b16 %v684
    %v963 = vunpack.c.h.b16 %v684
    %v964 = vunpack.c.l.b16 %v685
    %v965 = vunpack.c.l.b16 %v686
    %v966 = vunpack.c.h.b16 %v686
    %v967 = vunpack.c.l.b16 %v687
    %v968 = vunpack.c.h.b16 %v687
    %v969 = vunpack.c.l.b16 %v688
    %v970 = vunpack.c.l.b16 %v689
    %v971 = vunpack.c.h.b16 %v689
    %v972 = vunpack.c.l.b16 %v690
    %v973 = vunpack.c.h.b16 %v690
    %v974 = vunpack.c.l.b16 %v691
    %v975 = vpack.c.b16 %v820, %v815
    %v976 = vpack.c.b16 %v821, %v816
    %v977 = vpack.c.b16 %v822, %v817
    %v978 = vpack.c.b16 %v823, %v818
    %v979 = vpack.c.b16 %v824, %v819
    %v980 = vpack.c.b16 %v830, %v825
    %v981 = vpack.c.b16 %v831, %v826
    %v982 = vpack.c.b16 %v832, %v827
    %v983 = vpack.c.b16 %v833, %v828
    %v984 = vpack.c.b16 %v834, %v829
    %v985 = vpack.c.b16 %v840, %v835
    %v986 = vpack.c.b16 %v841, %v836
    %v987 = vpack.c.b16 %v842, %v837
    %v988 = vpack.c.b16 %v843, %v838
    %v989 = vpack.c.b16 %v844, %v839
    %v990 = vpack.c.b16 %v850, %v845
    %v991 = vpack.c.b16 %v851, %v846
    %v992 = vpack.c.b16 %v852, %v847
    %v993 = vpack.c.b16 %v853, %v848
    %v994 = vpack.c.b16 %v854, %v849
    %v995 = vpack.c.b16 %v860, %v855
    %v996 = vpack.c.b16 %v861, %v856
    %v997 = vpack.c.b16 %v862, %v857
    %v998 = vpack.c.b16 %v863, %v858
    %v999 = vpack.c.b16 %v864, %v859
    %v1000 = vpack.c.b16 %v870, %v865
    %v1001 = vpack.c.b16 %v871, %v866
    %v1002 = vpack.c.b16 %v872, %v867
    %v1003 = vpack.c.b16 %v873, %v868
    %v1004 = vpack.c.b16 %v874, %v869
    %v1005 = vpack.c.b16 %v880, %v875
    %v1006 = vpack.c.b16 %v881, %v876
    %v1007 = vpack.c.b16 %v882, %v877
    %v1008 = vpack.c.b16 %v883, %v878
    %v1009 = vpack.c.b16 %v884, %v879
    %v1010 = vpack.c.b16 %v890, %v885
    %v1011 = vpack.c.b16 %v891, %v886
    %v1012 = vpack.c.b16 %v892, %v887
    %v1013 = vpack.c.b16 %v893, %v888
    %v1014 = vpack.c.b16 %v894, %v889
    %v1015 = vpack.c.b16 %v900, %v895
    %v1016 = vpack.c.b16 %v901, %v896
    %v1017 = vpack.c.b16 %v902, %v897
    %v1018 = vpack.c.b16 %v903, %v898
    %v1019 = vpack.c.b16 %v904, %v899
    %v1020 = vpack.c.b16 %v910, %v905
    %v1021 = vpack.c.b16 %v911, %v906
    %v1022 = vpack.c.b16 %v912, %v907
    %v1023 = vpack.c.b16 %v913, %v908
    %v1024 = vpack.c.b16 %v914, %v909
    %v1025 = vpack.c.b16 %v920, %v915
    %v1026 = vpack.c.b16 %v921, %v916
    %v1027 = vpack.c.b16 %v922, %v917
    %v1028 = vpack.c.b16 %v923, %v918
    %v1029 = vpack.c.b16 %v924, %v919
    %v1030 = vpack.c.b16 %v930, %v925
    %v1031 = vpack.c.b16 %v931, %v926
    %v1032 = vpack.c.b16 %v932, %v927
    %v1033 = vpack.c.b16 %v933, %v928
    %v1034 = vpack.c.b16 %v934, %v929
    %v1035 = vpack.c.b16 %v940, %v935
    %v1036 = vpack.c.b16 %v941, %v936
    %v1037 = vpack.c.b16 %v942, %v937
    %v1038 = vpack.c.b16 %v943, %v938
    %v1039 = vpack.c.b16 %v944, %v939
    %v1040 = vpack.c.b16 %v950, %v945
    %v1041 = vpack.c.b16 %v951, %v946
    %v1042 = vpack.c.b16 %v952, %v947
    %v1043 = vpack.c.b16 %v953, %v948
    %v1044 = vpack.c.b16 %v954, %v949
    %v1045 = vpack.c.b16 %v960, %v955
    %v1046 = vpack.c.b16 %v961, %v956
    %v1047 = vpack.c.b16 %v962, %v957
    %v1048 = vpack.c.b16 %v963, %v958
    %v1049 = vpack.c.b16 %v964, %v959
    %v1050 = vpack.c.b16 %v970, %v965
    %v1051 = vpack.c.b16 %v971, %v966
    %v1052 = vpack.c.b16 %v972, %v967
    %v1053 = vpack.c.b16 %v973, %v968
    %v1054 = vpack.c.b16 %v974, %v969
    %1135 = vmatprep.subr.bf16.mxu0 %v976
    %1136 = vmatpush1.bf16.msra.mxu0 %v975
    %1137 = vmatprep.subr.bf16.mxu0 %v981
    %1138 = vmatpush1.bf16.msra.mxu0 %v980
    %1139 = vmatprep.subr.bf16.mxu0 %v986
    %1140 = vmatpush1.bf16.msra.mxu0 %v985
    %1141 = vmatprep.subr.bf16.mxu0 %v991
    %1142 = vmatpush1.bf16.msra.mxu0 %v990
    %1143 = vmatprep.subr.bf16.mxu0 %v996
    %1144 = vmatpush1.bf16.msra.mxu0 %v995
    %1145 = vmatprep.subr.bf16.mxu0 %v1001
    %1146 = vmatpush1.bf16.msra.mxu0 %v1000
    %1147 = vmatprep.subr.bf16.mxu0 %v1006
    %1148 = vmatpush1.bf16.msra.mxu0 %v1005
    %1149 = vmatprep.subr.bf16.mxu0 %v1011
    %1150 = vmatpush1.bf16.msra.mxu0 %v1010
    %1151 = vmatprep.subr.bf16.mxu0 %v1016
    %1152 = vmatpush1.bf16.msra.mxu0 %v1015
    %1153 = vmatprep.subr.bf16.mxu0 %v1021
    %1154 = vmatpush1.bf16.msra.mxu0 %v1020
    %1155 = vmatprep.subr.bf16.mxu0 %v1026
    %1156 = vmatpush1.bf16.msra.mxu0 %v1025
    %1157 = vmatprep.subr.bf16.mxu0 %v1031
    %1158 = vmatpush1.bf16.msra.mxu0 %v1030
    %1159 = vmatprep.subr.bf16.mxu0 %v1036
    %1160 = vmatpush1.bf16.msra.mxu0 %v1035
    %1161 = vmatprep.subr.bf16.mxu0 %v1041
    %1162 = vmatpush1.bf16.msra.mxu0 %v1040
    %1163 = vmatprep.subr.bf16.mxu0 %v1046
    %1164 = vmatpush1.bf16.msra.mxu0 %v1045
    %1165 = vmatprep.subr.bf16.mxu0 %v1051
    %1166 = vmatpush1.bf16.msra.mxu0 %v1050
    %1167 = vmatprep.mubr.bf16.mxu0 %v595
    %1168 = vmatmul.mubr.bf16.gmra.mrb[0].mxu0 %v594
    %v1169 = vpop.f32.mrb[0].mxu0
    %v1170 = vadd.f32 %v697, %v1169
    %v1171 = vpop.f32.mrb[0].mxu0
    %v1172 = vadd.f32 %v701, %v1171
    %v1173 = vpop.f32.mrb[0].mxu0
    %v1174 = vpop.f32.mrb[0].mxu0
    %1175 = vdwg.mxu0
    %1176 = vmatprep.subr.bf16.mxu0 %v978
    %1177 = vmatpush1.bf16.msra.mxu0 %v977
    %1178 = vmatprep.subr.bf16.mxu0 %v983
    %1179 = vmatpush1.bf16.msra.mxu0 %v982
    %1180 = vmatprep.subr.bf16.mxu0 %v988
    %1181 = vmatpush1.bf16.msra.mxu0 %v987
    %1182 = vmatprep.subr.bf16.mxu0 %v993
    %1183 = vmatpush1.bf16.msra.mxu0 %v992
    %1184 = vmatprep.subr.bf16.mxu0 %v998
    %1185 = vmatpush1.bf16.msra.mxu0 %v997
    %1186 = vmatprep.subr.bf16.mxu0 %v1003
    %1187 = vmatpush1.bf16.msra.mxu0 %v1002
    %1188 = vmatprep.subr.bf16.mxu0 %v1008
    %1189 = vmatpush1.bf16.msra.mxu0 %v1007
    %1190 = vmatprep.subr.bf16.mxu0 %v1013
    %1191 = vmatpush1.bf16.msra.mxu0 %v1012
    %1192 = vmatprep.subr.bf16.mxu0 %v1018
    %1193 = vmatpush1.bf16.msra.mxu0 %v1017
    %1194 = vmatprep.subr.bf16.mxu0 %v1023
    %1195 = vmatpush1.bf16.msra.mxu0 %v1022
    %1196 = vmatprep.subr.bf16.mxu0 %v1028
    %1197 = vmatpush1.bf16.msra.mxu0 %v1027
    %1198 = vmatprep.subr.bf16.mxu0 %v1033
    %1199 = vmatpush1.bf16.msra.mxu0 %v1032
    %1200 = vmatprep.subr.bf16.mxu0 %v1038
    %1201 = vmatpush1.bf16.msra.mxu0 %v1037
    %1202 = vmatprep.subr.bf16.mxu0 %v1043
    %1203 = vmatpush1.bf16.msra.mxu0 %v1042
    %1204 = vmatprep.subr.bf16.mxu0 %v1048
    %1205 = vmatpush1.bf16.msra.mxu0 %v1047
    %1206 = vmatprep.subr.bf16.mxu0 %v1053
    %1207 = vmatpush1.bf16.msra.mxu0 %v1052
    %1208 = vmatprep.mubr.bf16.mxu0 %v595
    %1209 = vmatmul.mubr.bf16.gmra.mrb[0].mxu0 %v594
    %v1210 = vpop.f32.mrb[0].mxu0
    %v1211 = vadd.f32 %v705, %v1210
    %v1212 = vpop.f32.mrb[0].mxu0
    %v1213 = vadd.f32 %v709, %v1212
    %v1214 = vpop.f32.mrb[0].mxu0
    %v1215 = vpop.f32.mrb[0].mxu0
    %1216 = vdwg.mxu0
    %1217 = vmatprep.subr.bf16.mxu0 0
    %1218 = vmatpush1.bf16.msra.mxu0 %v979
    %1219 = vmatprep.subr.bf16.mxu0 0
    %1220 = vmatpush1.bf16.msra.mxu0 %v984
    %1221 = vmatprep.subr.bf16.mxu0 0
    %1222 = vmatpush1.bf16.msra.mxu0 %v989
    %1223 = vmatprep.subr.bf16.mxu0 0
    %1224 = vmatpush1.bf16.msra.mxu0 %v994
    %1225 = vmatprep.subr.bf16.mxu0 0
    %1226 = vmatpush1.bf16.msra.mxu0 %v999
    %1227 = vmatprep.subr.bf16.mxu0 0
    %1228 = vmatpush1.bf16.msra.mxu0 %v1004
    %1229 = vmatprep.subr.bf16.mxu0 0
    %1230 = vmatpush1.bf16.msra.mxu0 %v1009
    %1231 = vmatprep.subr.bf16.mxu0 0
    %1232 = vmatpush1.bf16.msra.mxu0 %v1014
    %1233 = vmatprep.subr.bf16.mxu0 0
    %1234 = vmatpush1.bf16.msra.mxu0 %v1019
    %1235 = vmatprep.subr.bf16.mxu0 0
    %1236 = vmatpush1.bf16.msra.mxu0 %v1024
    %1237 = vmatprep.subr.bf16.mxu0 0
    %1238 = vmatpush1.bf16.msra.mxu0 %v1029
    %1239 = vmatprep.subr.bf16.mxu0 0
    %1240 = vmatpush1.bf16.msra.mxu0 %v1034
    %1241 = vmatprep.subr.bf16.mxu0 0
    %1242 = vmatpush1.bf16.msra.mxu0 %v1039
    %1243 = vmatprep.subr.bf16.mxu0 0
    %1244 = vmatpush1.bf16.msra.mxu0 %v1044
    %1245 = vmatprep.subr.bf16.mxu0 0
    %1246 = vmatpush1.bf16.msra.mxu0 %v1049
    %1247 = vmatprep.subr.bf16.mxu0 0
    %1248 = vmatpush1.bf16.msra.mxu0 %v1054
    %1249 = vmatprep.mubr.bf16.mxu0 %v595
    %1250 = vmatmul.mubr.bf16.gmra.mrb[0].mxu0 %v594
    %v1251 = vpop.f32.mrb[0].mxu0
    %v1252 = vadd.f32 %v713, %v1251
    %v1253 = vpop.f32.mrb[0].mxu0
    %v1254 = vpop.f32.mrb[0].mxu0
    %v1255 = vpop.f32.mrb[0].mxu0
    %1256 = vdwg.mxu0
    %v1257 = vld [vmem:[%s8] sm:$0xff]
    %v1258 = vld [vmem:[%s8 + $0x8] sm:$0xff]
    %v1259 = vld [vmem:[%s8 + $0x10] sm:$0xff]
    %v1260 = vld [vmem:[%s8 + $0x18] sm:$0xff]
    %v1261 = vld [vmem:[%s8 + $0x20] sm:$0xff]
    %v1262 = vld [vmem:[%s8 + $0x28] sm:$0xff]
    %v1263 = vld [vmem:[%s8 + $0x30] sm:$0xff]
    %v1264 = vld [vmem:[%s8 + $0x38] sm:$0xff]
    %v1265 = vld [vmem:[%s8 + $0x40] sm:$0xff]
    %v1266 = vld [vmem:[%s8 + $0x48] sm:$0xff]
    %v1267 = vld [vmem:[%s8 + $0x50] sm:$0xff]
    %v1268 = vld [vmem:[%s8 + $0x58] sm:$0xff]
    %v1269 = vld [vmem:[%s8 + $0x60] sm:$0xff]
    %v1270 = vld [vmem:[%s8 + $0x68] sm:$0xff]
    %v1271 = vld [vmem:[%s8 + $0x70] sm:$0xff]
    %v1272 = vld [vmem:[%s8 + $0x78] sm:$0xff]
    %v1273 = vld [vmem:[%s8 + $0x80] sm:$0xff]
    %v1274 = vld [vmem:[%s8 + $0x88] sm:$0xff]
    %v1275 = vld [vmem:[%s8 + $0x90] sm:$0xff]
    %v1276 = vld [vmem:[%s8 + $0x98] sm:$0xff]
    %v1277 = vld [vmem:[%s8 + $0xa0] sm:$0xff]
    %v1278 = vld [vmem:[%s8 + $0xa8] sm:$0xff]
    %v1279 = vld [vmem:[%s8 + $0xb0] sm:$0xff]
    %v1280 = vld [vmem:[%s8 + $0xb8] sm:$0xff]
    %v1281 = vld [vmem:[%s8 + $0xc0] sm:$0xff]
    %v1282 = vld [vmem:[%s8 + $0xc8] sm:$0xff]
    %v1283 = vld [vmem:[%s8 + $0xd0] sm:$0xff]
    %v1284 = vld [vmem:[%s8 + $0xd8] sm:$0xff]
    %v1285 = vld [vmem:[%s8 + $0xe0] sm:$0xff]
    %v1286 = vld [vmem:[%s8 + $0xe8] sm:$0xff]
    %v1287 = vld [vmem:[%s8 + $0xf0] sm:$0xff]
    %v1288 = vld [vmem:[%s8 + $0xf8] sm:$0xff]
    %v1289 = vld [vmem:[%s9] sm:$0x3]
    %v1291 = vlaneseq
    %v1292 = vshrl.u32 %v1291, 7
    %v1293 = vsub.s32 0, %v1292
    %v1294 = vrot.slane %v1289, %v1293
    %v1295 = vlaneseq
    %v1296 = vshrl.u32 %v1295, 7
    %v1297 = vsub.s32 1, %v1296
    %v1298 = vrot.slane %v1289, %v1297
    %v1333 = vunpack.c.l.b16 %v1257
    %v1334 = vunpack.c.h.b16 %v1257
    %v1335 = vunpack.c.l.b16 %v1258
    %v1336 = vunpack.c.h.b16 %v1258
    %v1337 = vunpack.c.l.b16 %v1259
    %v1338 = vunpack.c.h.b16 %v1259
    %v1339 = vunpack.c.l.b16 %v1260
    %v1340 = vunpack.c.h.b16 %v1260
    %v1341 = vunpack.c.l.b16 %v1261
    %v1342 = vunpack.c.h.b16 %v1261
    %v1343 = vunpack.c.l.b16 %v1262
    %v1344 = vunpack.c.h.b16 %v1262
    %v1345 = vunpack.c.l.b16 %v1263
    %v1346 = vunpack.c.h.b16 %v1263
    %v1347 = vunpack.c.l.b16 %v1264
    %v1348 = vunpack.c.h.b16 %v1264
    %v1349 = vunpack.c.l.b16 %v1265
    %v1350 = vunpack.c.h.b16 %v1265
    %v1351 = vunpack.c.l.b16 %v1266
    %v1352 = vunpack.c.h.b16 %v1266
    %v1353 = vunpack.c.l.b16 %v1267
    %v1354 = vunpack.c.h.b16 %v1267
    %v1355 = vunpack.c.l.b16 %v1268
    %v1356 = vunpack.c.h.b16 %v1268
    %v1357 = vunpack.c.l.b16 %v1269
    %v1358 = vunpack.c.h.b16 %v1269
    %v1359 = vunpack.c.l.b16 %v1270
    %v1360 = vunpack.c.h.b16 %v1270
    %v1361 = vunpack.c.l.b16 %v1271
    %v1362 = vunpack.c.h.b16 %v1271
    %v1363 = vunpack.c.l.b16 %v1272
    %v1364 = vunpack.c.h.b16 %v1272
    %v1365 = vunpack.c.l.b16 %v1273
    %v1366 = vunpack.c.h.b16 %v1273
    %v1367 = vunpack.c.l.b16 %v1274
    %v1368 = vunpack.c.h.b16 %v1274
    %v1369 = vunpack.c.l.b16 %v1275
    %v1370 = vunpack.c.h.b16 %v1275
    %v1371 = vunpack.c.l.b16 %v1276
    %v1372 = vunpack.c.h.b16 %v1276
    %v1373 = vunpack.c.l.b16 %v1277
    %v1374 = vunpack.c.h.b16 %v1277
    %v1375 = vunpack.c.l.b16 %v1278
    %v1376 = vunpack.c.h.b16 %v1278
    %v1377 = vunpack.c.l.b16 %v1279
    %v1378 = vunpack.c.h.b16 %v1279
    %v1379 = vunpack.c.l.b16 %v1280
    %v1380 = vunpack.c.h.b16 %v1280
    %v1381 = vunpack.c.l.b16 %v1281
    %v1382 = vunpack.c.h.b16 %v1281
    %v1383 = vunpack.c.l.b16 %v1282
    %v1384 = vunpack.c.h.b16 %v1282
    %v1385 = vunpack.c.l.b16 %v1283
    %v1386 = vunpack.c.h.b16 %v1283
    %v1387 = vunpack.c.l.b16 %v1284
    %v1388 = vunpack.c.h.b16 %v1284
    %v1389 = vunpack.c.l.b16 %v1285
    %v1390 = vunpack.c.h.b16 %v1285
    %v1391 = vunpack.c.l.b16 %v1286
    %v1392 = vunpack.c.h.b16 %v1286
    %v1393 = vunpack.c.l.b16 %v1287
    %v1394 = vunpack.c.h.b16 %v1287
    %v1395 = vunpack.c.l.b16 %v1288
    %v1396 = vunpack.c.h.b16 %v1288
    %v1397 = vpack.c.b16 %v1335, %v1333
    %v1398 = vpack.c.b16 %v1336, %v1334
    %v1399 = vpack.c.b16 %v1339, %v1337
    %v1400 = vpack.c.b16 %v1340, %v1338
    %v1401 = vpack.c.b16 %v1343, %v1341
    %v1402 = vpack.c.b16 %v1344, %v1342
    %v1403 = vpack.c.b16 %v1347, %v1345
    %v1404 = vpack.c.b16 %v1348, %v1346
    %v1405 = vpack.c.b16 %v1351, %v1349
    %v1406 = vpack.c.b16 %v1352, %v1350
    %v1407 = vpack.c.b16 %v1355, %v1353
    %v1408 = vpack.c.b16 %v1356, %v1354
    %v1409 = vpack.c.b16 %v1359, %v1357
    %v1410 = vpack.c.b16 %v1360, %v1358
    %v1411 = vpack.c.b16 %v1363, %v1361
    %v1412 = vpack.c.b16 %v1364, %v1362
    %v1413 = vpack.c.b16 %v1367, %v1365
    %v1414 = vpack.c.b16 %v1368, %v1366
    %v1415 = vpack.c.b16 %v1371, %v1369
    %v1416 = vpack.c.b16 %v1372, %v1370
    %v1417 = vpack.c.b16 %v1375, %v1373
    %v1418 = vpack.c.b16 %v1376, %v1374
    %v1419 = vpack.c.b16 %v1379, %v1377
    %v1420 = vpack.c.b16 %v1380, %v1378
    %v1421 = vpack.c.b16 %v1383, %v1381
    %v1422 = vpack.c.b16 %v1384, %v1382
    %v1423 = vpack.c.b16 %v1387, %v1385
    %v1424 = vpack.c.b16 %v1388, %v1386
    %v1425 = vpack.c.b16 %v1391, %v1389
    %v1426 = vpack.c.b16 %v1392, %v1390
    %v1427 = vpack.c.b16 %v1395, %v1393
    %v1428 = vpack.c.b16 %v1396, %v1394
    %1461 = vmatprep.subr.bf16.mxu0 %v1398
    %1462 = vmatpush1.bf16.msra.mxu0 %v1397
    %1463 = vmatprep.subr.bf16.mxu0 %v1400
    %1464 = vmatpush1.bf16.msra.mxu0 %v1399
    %1465 = vmatprep.subr.bf16.mxu0 %v1402
    %1466 = vmatpush1.bf16.msra.mxu0 %v1401
    %1467 = vmatprep.subr.bf16.mxu0 %v1404
    %1468 = vmatpush1.bf16.msra.mxu0 %v1403
    %1469 = vmatprep.subr.bf16.mxu0 %v1406
    %1470 = vmatpush1.bf16.msra.mxu0 %v1405
    %1471 = vmatprep.subr.bf16.mxu0 %v1408
    %1472 = vmatpush1.bf16.msra.mxu0 %v1407
    %1473 = vmatprep.subr.bf16.mxu0 %v1410
    %1474 = vmatpush1.bf16.msra.mxu0 %v1409
    %1475 = vmatprep.subr.bf16.mxu0 %v1412
    %1476 = vmatpush1.bf16.msra.mxu0 %v1411
    %1477 = vmatprep.subr.bf16.mxu0 %v1414
    %1478 = vmatpush1.bf16.msra.mxu0 %v1413
    %1479 = vmatprep.subr.bf16.mxu0 %v1416
    %1480 = vmatpush1.bf16.msra.mxu0 %v1415
    %1481 = vmatprep.subr.bf16.mxu0 %v1418
    %1482 = vmatpush1.bf16.msra.mxu0 %v1417
    %1483 = vmatprep.subr.bf16.mxu0 %v1420
    %1484 = vmatpush1.bf16.msra.mxu0 %v1419
    %1485 = vmatprep.subr.bf16.mxu0 %v1422
    %1486 = vmatpush1.bf16.msra.mxu0 %v1421
    %1487 = vmatprep.subr.bf16.mxu0 %v1424
    %1488 = vmatpush1.bf16.msra.mxu0 %v1423
    %1489 = vmatprep.subr.bf16.mxu0 %v1426
    %1490 = vmatpush1.bf16.msra.mxu0 %v1425
    %1491 = vmatprep.subr.bf16.mxu0 %v1428
    %1492 = vmatpush1.bf16.msra.mxu0 %v1427
    %1493 = vmatprep.mubr.bf16.mxu0 %v595
    %1494 = vmatmul.mubr.bf16.gmra.mrb[0].mxu0 %v594
    %v1495 = vpop.f32.mrb[0].mxu0
    %v1496 = vadd.f32 %v1294, %v1495
    %v1497 = vpop.f32.mrb[0].mxu0
    %v1498 = vadd.f32 %v1298, %v1497
    %v1499 = vpop.f32.mrb[0].mxu0
    %v1500 = vpop.f32.mrb[0].mxu0
    %1501 = vdwg.mxu0
    %v1502 = vmin.f32 %v1170, 80.0
    %v1503 = vmin.f32 %v1172, 80.0
    %v1504 = vmin.f32 %v1211, 80.0
    %v1505 = vmin.f32 %v1213, 80.0
    %v1506 = vmin.f32 %v1252, 80.0
    %v1507 = vmul.f32 %v1502, 1.442695
    %v1508 = vpow.pop %v1507
    %v1509 = vmul.f32 %v1503, 1.442695
    %v1510 = vpow.pop %v1509
    %v1511 = vmul.f32 %v1504, 1.442695
    %v1512 = vpow.pop %v1511
    %v1513 = vmul.f32 %v1505, 1.442695
    %v1514 = vpow.pop %v1513
    %v1515 = vmul.f32 %v1506, 1.442695
    %v1516 = vpow.pop %v1515
    %v1517 = vld [vmem:[#allocation2] sm:$0x7]
    %v1518 = vpack.c.bf16 %v1517, %v1517
    %v1519 = vld [vmem:[#allocation8] sm:$0xff]
    %v1520 = vld [vmem:[#allocation8 + $0x8] sm:$0xff]
    %v1521 = vld [vmem:[#allocation8 + $0x10] sm:$0xf]
    %v1522 = vld [vmem:[#allocation8 + $0x14] sm:$0xff]
    %v1523 = vld [vmem:[#allocation8 + $0x1c] sm:$0xff]
    %v1524 = vld [vmem:[#allocation8 + $0x24] sm:$0xf]
    %v1525 = vld [vmem:[#allocation8 + $0x28] sm:$0xff]
    %v1526 = vld [vmem:[#allocation8 + $0x30] sm:$0xff]
    %v1527 = vld [vmem:[#allocation8 + $0x38] sm:$0xf]
    %v1528 = vld [vmem:[#allocation8 + $0x3c] sm:$0xff]
    %v1529 = vld [vmem:[#allocation8 + $0x44] sm:$0xff]
    %v1530 = vld [vmem:[#allocation8 + $0x4c] sm:$0xf]
    %v1531 = vld [vmem:[#allocation8 + $0x50] sm:$0xff]
    %v1532 = vld [vmem:[#allocation8 + $0x58] sm:$0xff]
    %v1533 = vld [vmem:[#allocation8 + $0x60] sm:$0xf]
    %v1534 = vld [vmem:[#allocation8 + $0x64] sm:$0xff]
    %v1535 = vld [vmem:[#allocation8 + $0x6c] sm:$0xff]
    %v1536 = vld [vmem:[#allocation8 + $0x74] sm:$0xf]
    %v1537 = vld [vmem:[#allocation8 + $0x78] sm:$0xff]
    %v1538 = vld [vmem:[#allocation8 + $0x80] sm:$0xff]
    %v1539 = vld [vmem:[#allocation8 + $0x88] sm:$0xf]
    %v1540 = vld [vmem:[#allocation8 + $0x8c] sm:$0xff]
    %v1541 = vld [vmem:[#allocation8 + $0x94] sm:$0xff]
    %v1542 = vld [vmem:[#allocation8 + $0x9c] sm:$0xf]
    %v1567 = vunpack.c.l.b16 %v1519
    %v1568 = vunpack.c.h.b16 %v1519
    %v1569 = vunpack.c.l.b16 %v1520
    %v1570 = vunpack.c.h.b16 %v1520
    %v1571 = vunpack.c.l.b16 %v1521
    %v1572 = vunpack.c.l.b16 %v1522
    %v1573 = vunpack.c.h.b16 %v1522
    %v1574 = vunpack.c.l.b16 %v1523
    %v1575 = vunpack.c.h.b16 %v1523
    %v1576 = vunpack.c.l.b16 %v1524
    %v1577 = vunpack.c.l.b16 %v1525
    %v1578 = vunpack.c.h.b16 %v1525
    %v1579 = vunpack.c.l.b16 %v1526
    %v1580 = vunpack.c.h.b16 %v1526
    %v1581 = vunpack.c.l.b16 %v1527
    %v1582 = vunpack.c.l.b16 %v1528
    %v1583 = vunpack.c.h.b16 %v1528
    %v1584 = vunpack.c.l.b16 %v1529
    %v1585 = vunpack.c.h.b16 %v1529
    %v1586 = vunpack.c.l.b16 %v1530
    %v1587 = vunpack.c.l.b16 %v1531
    %v1588 = vunpack.c.h.b16 %v1531
    %v1589 = vunpack.c.l.b16 %v1532
    %v1590 = vunpack.c.h.b16 %v1532
    %v1591 = vunpack.c.l.b16 %v1533
    %v1592 = vunpack.c.l.b16 %v1534
    %v1593 = vunpack.c.h.b16 %v1534
    %v1594 = vunpack.c.l.b16 %v1535
    %v1595 = vunpack.c.h.b16 %v1535
    %v1596 = vunpack.c.l.b16 %v1536
    %v1597 = vunpack.c.l.b16 %v1537
    %v1598 = vunpack.c.h.b16 %v1537
    %v1599 = vunpack.c.l.b16 %v1538
    %v1600 = vunpack.c.h.b16 %v1538
    %v1601 = vunpack.c.l.b16 %v1539
    %v1602 = vunpack.c.l.b16 %v1540
    %v1603 = vunpack.c.h.b16 %v1540
    %v1604 = vunpack.c.l.b16 %v1541
    %v1605 = vunpack.c.h.b16 %v1541
    %v1606 = vunpack.c.l.b16 %v1542
    %v1607 = vpack.c.b16 %v1572, %v1567
    %v1608 = vpack.c.b16 %v1573, %v1568
    %v1609 = vpack.c.b16 %v1574, %v1569
    %v1610 = vpack.c.b16 %v1575, %v1570
    %v1611 = vpack.c.b16 %v1576, %v1571
    %v1612 = vpack.c.b16 %v1582, %v1577
    %v1613 = vpack.c.b16 %v1583, %v1578
    %v1614 = vpack.c.b16 %v1584, %v1579
    %v1615 = vpack.c.b16 %v1585, %v1580
    %v1616 = vpack.c.b16 %v1586, %v1581
    %v1617 = vpack.c.b16 %v1592, %v1587
    %v1618 = vpack.c.b16 %v1593, %v1588
    %v1619 = vpack.c.b16 %v1594, %v1589
    %v1620 = vpack.c.b16 %v1595, %v1590
    %v1621 = vpack.c.b16 %v1596, %v1591
    %v1622 = vpack.c.b16 %v1602, %v1597
    %v1623 = vpack.c.b16 %v1603, %v1598
    %v1624 = vpack.c.b16 %v1604, %v1599
    %v1625 = vpack.c.b16 %v1605, %v1600
    %v1626 = vpack.c.b16 %v1606, %v1601
    %v1648 = vsel %vm294, %v1518, 0
    %1650 = vmatprep.subr.bf16.mxu0 %v1608
    %1651 = vmatpush1.bf16.msra.mxu0 %v1607
    %1652 = vmatprep.subr.bf16.mxu0 %v1613
    %1653 = vmatpush1.bf16.msra.mxu0 %v1612
    %1654 = vmatprep.subr.bf16.mxu0 %v1618
    %1655 = vmatpush1.bf16.msra.mxu0 %v1617
    %1656 = vmatprep.subr.bf16.mxu0 %v1623
    %1657 = vmatpush1.bf16.msra.mxu0 %v1622
    %1658 = vmatprep.subr.bf16.mxu0 0
    %1659 = vmatpush1.bf16.msra.mxu0 0
    %1660 = vmatprep.subr.bf16.mxu0 0
    %1661 = vmatpush1.bf16.msra.mxu0 0
    %1662 = vmatprep.subr.bf16.mxu0 0
    %1663 = vmatpush1.bf16.msra.mxu0 0
    %1664 = vmatprep.subr.bf16.mxu0 0
    %1665 = vmatpush1.bf16.msra.mxu0 0
    %1666 = vmatprep.subr.bf16.mxu0 0
    %1667 = vmatpush1.bf16.msra.mxu0 0
    %1668 = vmatprep.subr.bf16.mxu0 0
    %1669 = vmatpush1.bf16.msra.mxu0 0
    %1670 = vmatprep.subr.bf16.mxu0 0
    %1671 = vmatpush1.bf16.msra.mxu0 0
    %1672 = vmatprep.subr.bf16.mxu0 0
    %1673 = vmatpush1.bf16.msra.mxu0 0
    %1674 = vmatprep.subr.bf16.mxu0 0
    %1675 = vmatpush1.bf16.msra.mxu0 0
    %1676 = vmatprep.subr.bf16.mxu0 0
    %1677 = vmatpush1.bf16.msra.mxu0 0
    %1678 = vmatprep.subr.bf16.mxu0 0
    %1679 = vmatpush1.bf16.msra.mxu0 0
    %1680 = vmatprep.subr.bf16.mxu0 0
    %1681 = vmatpush1.bf16.msra.mxu0 0
    %1682 = vmatprep.mubr.bf16.mxu0 0
    %1683 = vmatmul.mubr.bf16.gmra.mrb[0].mxu0 %v1648
    %v1684 = vpop.f32.mrb[0].mxu0
    %v1685 = vadd.f32 0.0, %v1684
    %v1686 = vpop.f32.mrb[0].mxu0
    %v1687 = vadd.f32 0.0, %v1686
    %v1688 = vpop.f32.mrb[0].mxu0
    %v1689 = vpop.f32.mrb[0].mxu0
    %1690 = vdwg.mxu0
    %1691 = vmatprep.subr.bf16.mxu0 %v1610
    %1692 = vmatpush1.bf16.msra.mxu0 %v1609
    %1693 = vmatprep.subr.bf16.mxu0 %v1615
    %1694 = vmatpush1.bf16.msra.mxu0 %v1614
    %1695 = vmatprep.subr.bf16.mxu0 %v1620
    %1696 = vmatpush1.bf16.msra.mxu0 %v1619
    %1697 = vmatprep.subr.bf16.mxu0 %v1625
    %1698 = vmatpush1.bf16.msra.mxu0 %v1624
    %1699 = vmatprep.subr.bf16.mxu0 0
    %1700 = vmatpush1.bf16.msra.mxu0 0
    %1701 = vmatprep.subr.bf16.mxu0 0
    %1702 = vmatpush1.bf16.msra.mxu0 0
    %1703 = vmatprep.subr.bf16.mxu0 0
    %1704 = vmatpush1.bf16.msra.mxu0 0
    %1705 = vmatprep.subr.bf16.mxu0 0
    %1706 = vmatpush1.bf16.msra.mxu0 0
    %1707 = vmatprep.subr.bf16.mxu0 0
    %1708 = vmatpush1.bf16.msra.mxu0 0
    %1709 = vmatprep.subr.bf16.mxu0 0
    %1710 = vmatpush1.bf16.msra.mxu0 0
    %1711 = vmatprep.subr.bf16.mxu0 0
    %1712 = vmatpush1.bf16.msra.mxu0 0
    %1713 = vmatprep.subr.bf16.mxu0 0
    %1714 = vmatpush1.bf16.msra.mxu0 0
    %1715 = vmatprep.subr.bf16.mxu0 0
    %1716 = vmatpush1.bf16.msra.mxu0 0
    %1717 = vmatprep.subr.bf16.mxu0 0
    %1718 = vmatpush1.bf16.msra.mxu0 0
    %1719 = vmatprep.subr.bf16.mxu0 0
    %1720 = vmatpush1.bf16.msra.mxu0 0
    %1721 = vmatprep.subr.bf16.mxu0 0
    %1722 = vmatpush1.bf16.msra.mxu0 0
    %1723 = vmatprep.mubr.bf16.mxu0 0
    %1724 = vmatmul.mubr.bf16.gmra.mrb[0].mxu0 %v1648
    %v1725 = vpop.f32.mrb[0].mxu0
    %v1726 = vadd.f32 0.0, %v1725
    %v1727 = vpop.f32.mrb[0].mxu0
    %v1728 = vadd.f32 0.0, %v1727
    %v1729 = vpop.f32.mrb[0].mxu0
    %v1730 = vpop.f32.mrb[0].mxu0
    %1731 = vdwg.mxu0
    %1732 = vmatprep.subr.bf16.mxu0 0
    %1733 = vmatpush1.bf16.msra.mxu0 %v1611
    %1734 = vmatprep.subr.bf16.mxu0 0
    %1735 = vmatpush1.bf16.msra.mxu0 %v1616
    %1736 = vmatprep.subr.bf16.mxu0 0
    %1737 = vmatpush1.bf16.msra.mxu0 %v1621
    %1738 = vmatprep.subr.bf16.mxu0 0
    %1739 = vmatpush1.bf16.msra.mxu0 %v1626
    %1740 = vmatprep.subr.bf16.mxu0 0
    %1741 = vmatpush1.bf16.msra.mxu0 0
    %1742 = vmatprep.subr.bf16.mxu0 0
    %1743 = vmatpush1.bf16.msra.mxu0 0
    %1744 = vmatprep.subr.bf16.mxu0 0
    %1745 = vmatpush1.bf16.msra.mxu0 0
    %1746 = vmatprep.subr.bf16.mxu0 0
    %1747 = vmatpush1.bf16.msra.mxu0 0
    %1748 = vmatprep.subr.bf16.mxu0 0
    %1749 = vmatpush1.bf16.msra.mxu0 0
    %1750 = vmatprep.subr.bf16.mxu0 0
    %1751 = vmatpush1.bf16.msra.mxu0 0
    %1752 = vmatprep.subr.bf16.mxu0 0
    %1753 = vmatpush1.bf16.msra.mxu0 0
    %1754 = vmatprep.subr.bf16.mxu0 0
    %1755 = vmatpush1.bf16.msra.mxu0 0
    %1756 = vmatprep.subr.bf16.mxu0 0
    %1757 = vmatpush1.bf16.msra.mxu0 0
    %1758 = vmatprep.subr.bf16.mxu0 0
    %1759 = vmatpush1.bf16.msra.mxu0 0
    %1760 = vmatprep.subr.bf16.mxu0 0
    %1761 = vmatpush1.bf16.msra.mxu0 0
    %1762 = vmatprep.subr.bf16.mxu0 0
    %1763 = vmatpush1.bf16.msra.mxu0 0
    %1764 = vmatprep.mubr.bf16.mxu0 0
    %1765 = vmatmul.mubr.bf16.gmra.mrb[0].mxu0 %v1648
    %v1766 = vpop.f32.mrb[0].mxu0
    %v1767 = vadd.f32 0.0, %v1766
    %v1768 = vpop.f32.mrb[0].mxu0
    %v1769 = vpop.f32.mrb[0].mxu0
    %v1770 = vpop.f32.mrb[0].mxu0
    %1771 = vdwg.mxu0
    %v1772 = vmul.f32 %v1508, %v1685
    %v1773 = vmul.f32 %v1510, %v1687
    %v1774 = vmul.f32 %v1512, %v1726
    %v1775 = vmul.f32 %v1514, %v1728
    %v1776 = vmul.f32 %v1516, %v1767
    %v1777 = vpack.c.bf16 %v1772, %v1772
    %v1778 = vpack.c.bf16 %v1773, %v1773
    %v1779 = vpack.c.bf16 %v1774, %v1774
    %v1780 = vpack.c.bf16 %v1775, %v1775
    %v1781 = vpack.c.bf16 %v1776, %v1776
    %v1782 = vld [vmem:[%s11] sm:$0xf]
    %v1783 = vld [vmem:[%s11 + $0x4] sm:$0xf]
    %v1784 = vld [vmem:[%s11 + $0x8] sm:$0xf]
    %v1785 = vld [vmem:[%s11 + $0xc] sm:$0xf]
    %v1786 = vld [vmem:[%s11 + $0x10] sm:$0xf]
    %v1787 = vld [vmem:[%s11 + $0x14] sm:$0xf]
    %v1788 = vld [vmem:[%s11 + $0x18] sm:$0xf]
    %v1789 = vld [vmem:[%s11 + $0x1c] sm:$0xf]
    %v1790 = vld [vmem:[%s11 + $0x20] sm:$0xf]
    %v1791 = vld [vmem:[%s11 + $0x24] sm:$0xf]
    %v1792 = vld [vmem:[%s11 + $0x28] sm:$0xf]
    %v1793 = vld [vmem:[%s11 + $0x2c] sm:$0xf]
    %v1794 = vld [vmem:[%s11 + $0x30] sm:$0xf]
    %v1795 = vld [vmem:[%s11 + $0x34] sm:$0xf]
    %v1796 = vld [vmem:[%s11 + $0x38] sm:$0xf]
    %v1797 = vld [vmem:[%s11 + $0x3c] sm:$0xf]
    %v1798 = vld [vmem:[%s11 + $0x40] sm:$0xf]
    %v1799 = vld [vmem:[%s11 + $0x44] sm:$0xf]
    %v1800 = vld [vmem:[%s11 + $0x48] sm:$0xf]
    %v1801 = vld [vmem:[%s11 + $0x4c] sm:$0xf]
    %v1802 = vld [vmem:[%s11 + $0x50] sm:$0xf]
    %v1803 = vld [vmem:[%s11 + $0x54] sm:$0xf]
    %v1804 = vld [vmem:[%s11 + $0x58] sm:$0xf]
    %v1805 = vld [vmem:[%s11 + $0x5c] sm:$0xf]
    %v1806 = vld [vmem:[%s11 + $0x60] sm:$0xf]
    %v1807 = vld [vmem:[%s11 + $0x64] sm:$0xf]
    %v1808 = vld [vmem:[%s11 + $0x68] sm:$0xf]
    %v1809 = vld [vmem:[%s11 + $0x6c] sm:$0xf]
    %v1810 = vld [vmem:[%s11 + $0x70] sm:$0xf]
    %v1811 = vld [vmem:[%s11 + $0x74] sm:$0xf]
    %v1812 = vld [vmem:[%s11 + $0x78] sm:$0xf]
    %v1813 = vld [vmem:[%s11 + $0x7c] sm:$0xf]
    %v1814 = vld [vmem:[%s11 + $0x80] sm:$0xf]
    %v1815 = vld [vmem:[%s11 + $0x84] sm:$0xf]
    %v1816 = vld [vmem:[%s11 + $0x88] sm:$0xf]
    %v1817 = vld [vmem:[%s11 + $0x8c] sm:$0xf]
    %v1818 = vld [vmem:[%s11 + $0x90] sm:$0xf]
    %v1819 = vld [vmem:[%s11 + $0x94] sm:$0xf]
    %v1820 = vld [vmem:[%s11 + $0x98] sm:$0xf]
    %v1821 = vld [vmem:[%s11 + $0x9c] sm:$0xf]
    %v1822 = vld [vmem:[%s11 + $0xa0] sm:$0xf]
    %v1823 = vld [vmem:[%s11 + $0xa4] sm:$0xf]
    %v1824 = vld [vmem:[%s11 + $0xa8] sm:$0xf]
    %v1825 = vld [vmem:[%s11 + $0xac] sm:$0xf]
    %v1826 = vld [vmem:[%s11 + $0xb0] sm:$0xf]
    %v1827 = vld [vmem:[%s11 + $0xb4] sm:$0xf]
    %v1828 = vld [vmem:[%s11 + $0xb8] sm:$0xf]
    %v1829 = vld [vmem:[%s11 + $0xbc] sm:$0xf]
    %v1830 = vld [vmem:[%s11 + $0xc0] sm:$0xf]
    %v1831 = vld [vmem:[%s11 + $0xc4] sm:$0xf]
    %v1832 = vld [vmem:[%s11 + $0xc8] sm:$0xf]
    %v1833 = vld [vmem:[%s11 + $0xcc] sm:$0xf]
    %v1834 = vld [vmem:[%s11 + $0xd0] sm:$0xf]
    %v1835 = vld [vmem:[%s11 + $0xd4] sm:$0xf]
    %v1836 = vld [vmem:[%s11 + $0xd8] sm:$0xf]
    %v1837 = vld [vmem:[%s11 + $0xdc] sm:$0xf]
    %v1838 = vld [vmem:[%s11 + $0xe0] sm:$0xf]
    %v1839 = vld [vmem:[%s11 + $0xe4] sm:$0xf]
    %v1840 = vld [vmem:[%s11 + $0xe8] sm:$0xf]
    %v1841 = vld [vmem:[%s11 + $0xec] sm:$0xf]
    %v1842 = vld [vmem:[%s11 + $0xf0] sm:$0xf]
    %v1843 = vld [vmem:[%s11 + $0xf4] sm:$0xf]
    %v1844 = vld [vmem:[%s11 + $0xf8] sm:$0xf]
    %v1845 = vld [vmem:[%s11 + $0xfc] sm:$0xf]
    %v1846 = vld [vmem:[%s11 + $0x100] sm:$0xf]
    %v1847 = vld [vmem:[%s11 + $0x104] sm:$0xf]
    %v1848 = vld [vmem:[%s11 + $0x108] sm:$0xf]
    %v1849 = vld [vmem:[%s11 + $0x10c] sm:$0xf]
    %v1850 = vld [vmem:[%s11 + $0x110] sm:$0xf]
    %v1851 = vld [vmem:[%s11 + $0x114] sm:$0xf]
    %v1852 = vld [vmem:[%s11 + $0x118] sm:$0xf]
    %v1853 = vld [vmem:[%s11 + $0x11c] sm:$0xf]
    %v1854 = vld [vmem:[%s11 + $0x120] sm:$0xf]
    %v1855 = vld [vmem:[%s11 + $0x124] sm:$0xf]
    %v1856 = vld [vmem:[%s11 + $0x128] sm:$0xf]
    %v1857 = vld [vmem:[%s11 + $0x12c] sm:$0xf]
    %v1858 = vld [vmem:[%s11 + $0x130] sm:$0xf]
    %v1859 = vld [vmem:[%s11 + $0x134] sm:$0xf]
    %v1860 = vld [vmem:[%s11 + $0x138] sm:$0xf]
    %v1861 = vld [vmem:[%s11 + $0x13c] sm:$0xf]
    %v1942 = vunpack.c.l.b16 %v1782
    %v1943 = vunpack.c.l.b16 %v1783
    %v1944 = vunpack.c.l.b16 %v1784
    %v1945 = vunpack.c.l.b16 %v1785
    %v1946 = vunpack.c.l.b16 %v1786
    %v1947 = vunpack.c.l.b16 %v1787
    %v1948 = vunpack.c.l.b16 %v1788
    %v1949 = vunpack.c.l.b16 %v1789
    %v1950 = vunpack.c.l.b16 %v1790
    %v1951 = vunpack.c.l.b16 %v1791
    %v1952 = vunpack.c.l.b16 %v1792
    %v1953 = vunpack.c.l.b16 %v1793
    %v1954 = vunpack.c.l.b16 %v1794
    %v1955 = vunpack.c.l.b16 %v1795
    %v1956 = vunpack.c.l.b16 %v1796
    %v1957 = vunpack.c.l.b16 %v1797
    %v1958 = vunpack.c.l.b16 %v1798
    %v1959 = vunpack.c.l.b16 %v1799
    %v1960 = vunpack.c.l.b16 %v1800
    %v1961 = vunpack.c.l.b16 %v1801
    %v1962 = vunpack.c.l.b16 %v1802
    %v1963 = vunpack.c.l.b16 %v1803
    %v1964 = vunpack.c.l.b16 %v1804
    %v1965 = vunpack.c.l.b16 %v1805
    %v1966 = vunpack.c.l.b16 %v1806
    %v1967 = vunpack.c.l.b16 %v1807
    %v1968 = vunpack.c.l.b16 %v1808
    %v1969 = vunpack.c.l.b16 %v1809
    %v1970 = vunpack.c.l.b16 %v1810
    %v1971 = vunpack.c.l.b16 %v1811
    %v1972 = vunpack.c.l.b16 %v1812
    %v1973 = vunpack.c.l.b16 %v1813
    %v1974 = vunpack.c.l.b16 %v1814
    %v1975 = vunpack.c.l.b16 %v1815
    %v1976 = vunpack.c.l.b16 %v1816
    %v1977 = vunpack.c.l.b16 %v1817
    %v1978 = vunpack.c.l.b16 %v1818
    %v1979 = vunpack.c.l.b16 %v1819
    %v1980 = vunpack.c.l.b16 %v1820
    %v1981 = vunpack.c.l.b16 %v1821
    %v1982 = vunpack.c.l.b16 %v1822
    %v1983 = vunpack.c.l.b16 %v1823
    %v1984 = vunpack.c.l.b16 %v1824
    %v1985 = vunpack.c.l.b16 %v1825
    %v1986 = vunpack.c.l.b16 %v1826
    %v1987 = vunpack.c.l.b16 %v1827
    %v1988 = vunpack.c.l.b16 %v1828
    %v1989 = vunpack.c.l.b16 %v1829
    %v1990 = vunpack.c.l.b16 %v1830
    %v1991 = vunpack.c.l.b16 %v1831
    %v1992 = vunpack.c.l.b16 %v1832
    %v1993 = vunpack.c.l.b16 %v1833
    %v1994 = vunpack.c.l.b16 %v1834
    %v1995 = vunpack.c.l.b16 %v1835
    %v1996 = vunpack.c.l.b16 %v1836
    %v1997 = vunpack.c.l.b16 %v1837
    %v1998 = vunpack.c.l.b16 %v1838
    %v1999 = vunpack.c.l.b16 %v1839
    %v2000 = vunpack.c.l.b16 %v1840
    %v2001 = vunpack.c.l.b16 %v1841
    %v2002 = vunpack.c.l.b16 %v1842
    %v2003 = vunpack.c.l.b16 %v1843
    %v2004 = vunpack.c.l.b16 %v1844
    %v2005 = vunpack.c.l.b16 %v1845
    %v2006 = vunpack.c.l.b16 %v1846
    %v2007 = vunpack.c.l.b16 %v1847
    %v2008 = vunpack.c.l.b16 %v1848
    %v2009 = vunpack.c.l.b16 %v1849
    %v2010 = vunpack.c.l.b16 %v1850
    %v2011 = vunpack.c.l.b16 %v1851
    %v2012 = vunpack.c.l.b16 %v1852
    %v2013 = vunpack.c.l.b16 %v1853
    %v2014 = vunpack.c.l.b16 %v1854
    %v2015 = vunpack.c.l.b16 %v1855
    %v2016 = vunpack.c.l.b16 %v1856
    %v2017 = vunpack.c.l.b16 %v1857
    %v2018 = vunpack.c.l.b16 %v1858
    %v2019 = vunpack.c.l.b16 %v1859
    %v2020 = vunpack.c.l.b16 %v1860
    %v2021 = vunpack.c.l.b16 %v1861
    %v2022 = vpack.c.b16 %v1943, %v1942
    %v2023 = vpack.c.b16 %v1945, %v1944
    %v2024 = vpack.c.b16 %v1947, %v1946
    %v2025 = vpack.c.b16 %v1949, %v1948
    %v2026 = vpack.c.b16 %v1951, %v1950
    %v2027 = vpack.c.b16 %v1953, %v1952
    %v2028 = vpack.c.b16 %v1955, %v1954
    %v2029 = vpack.c.b16 %v1957, %v1956
    %v2030 = vpack.c.b16 %v1959, %v1958
    %v2031 = vpack.c.b16 %v1961, %v1960
    %v2032 = vpack.c.b16 %v1963, %v1962
    %v2033 = vpack.c.b16 %v1965, %v1964
    %v2034 = vpack.c.b16 %v1967, %v1966
    %v2035 = vpack.c.b16 %v1969, %v1968
    %v2036 = vpack.c.b16 %v1971, %v1970
    %v2037 = vpack.c.b16 %v1973, %v1972
    %v2038 = vpack.c.b16 %v1975, %v1974
    %v2039 = vpack.c.b16 %v1977, %v1976
    %v2040 = vpack.c.b16 %v1979, %v1978
    %v2041 = vpack.c.b16 %v1981, %v1980
    %v2042 = vpack.c.b16 %v1983, %v1982
    %v2043 = vpack.c.b16 %v1985, %v1984
    %v2044 = vpack.c.b16 %v1987, %v1986
    %v2045 = vpack.c.b16 %v1989, %v1988
    %v2046 = vpack.c.b16 %v1991, %v1990
    %v2047 = vpack.c.b16 %v1993, %v1992
    %v2048 = vpack.c.b16 %v1995, %v1994
    %v2049 = vpack.c.b16 %v1997, %v1996
    %v2050 = vpack.c.b16 %v1999, %v1998
    %v2051 = vpack.c.b16 %v2001, %v2000
    %v2052 = vpack.c.b16 %v2003, %v2002
    %v2053 = vpack.c.b16 %v2005, %v2004
    %v2054 = vpack.c.b16 %v2007, %v2006
    %v2055 = vpack.c.b16 %v2009, %v2008
    %v2056 = vpack.c.b16 %v2011, %v2010
    %v2057 = vpack.c.b16 %v2013, %v2012
    %v2058 = vpack.c.b16 %v2015, %v2014
    %v2059 = vpack.c.b16 %v2017, %v2016
    %v2060 = vpack.c.b16 %v2019, %v2018
    %v2061 = vpack.c.b16 %v2021, %v2020
    %2102 = vmatprep.subr.bf16.mxu0 0
    %2103 = vmatpush1.bf16.msra.mxu0 %v2022
    %2104 = vmatprep.subr.bf16.mxu0 0
    %2105 = vmatpush1.bf16.msra.mxu0 %v2023
    %2106 = vmatprep.subr.bf16.mxu0 0
    %2107 = vmatpush1.bf16.msra.mxu0 %v2024
    %2108 = vmatprep.subr.bf16.mxu0 0
    %2109 = vmatpush1.bf16.msra.mxu0 %v2025
    %2110 = vmatprep.subr.bf16.mxu0 0
    %2111 = vmatpush1.bf16.msra.mxu0 %v2026
    %2112 = vmatprep.subr.bf16.mxu0 0
    %2113 = vmatpush1.bf16.msra.mxu0 %v2027
    %2114 = vmatprep.subr.bf16.mxu0 0
    %2115 = vmatpush1.bf16.msra.mxu0 %v2028
    %2116 = vmatprep.subr.bf16.mxu0 0
    %2117 = vmatpush1.bf16.msra.mxu0 %v2029
    %2118 = vmatprep.subr.bf16.mxu0 0
    %2119 = vmatpush1.bf16.msra.mxu0 %v2030
    %2120 = vmatprep.subr.bf16.mxu0 0
    %2121 = vmatpush1.bf16.msra.mxu0 %v2031
    %2122 = vmatprep.subr.bf16.mxu0 0
    %2123 = vmatpush1.bf16.msra.mxu0 %v2032
    %2124 = vmatprep.subr.bf16.mxu0 0
    %2125 = vmatpush1.bf16.msra.mxu0 %v2033
    %2126 = vmatprep.subr.bf16.mxu0 0
    %2127 = vmatpush1.bf16.msra.mxu0 %v2034
    %2128 = vmatprep.subr.bf16.mxu0 0
    %2129 = vmatpush1.bf16.msra.mxu0 %v2035
    %2130 = vmatprep.subr.bf16.mxu0 0
    %2131 = vmatpush1.bf16.msra.mxu0 %v2036
    %2132 = vmatprep.subr.bf16.mxu0 0
    %2133 = vmatpush1.bf16.msra.mxu0 %v2037
    %2134 = vmatprep.mubr.bf16.mxu0 %v1778
    %2135 = vmatmul.mubr.bf16.gmra.mrb[0].mxu0 %v1777
    %v2136 = vpop.f32.mrb[0].mxu0
    %v2137 = vadd.f32 0.0, %v2136
    %v2138 = vpop.f32.mrb[0].mxu0
    %v2139 = vpop.f32.mrb[0].mxu0
    %v2140 = vpop.f32.mrb[0].mxu0
    %2141 = vdwg.mxu0
    %2142 = vmatprep.subr.bf16.mxu0 0
    %2143 = vmatpush1.bf16.msra.mxu0 %v2038
    %2144 = vmatprep.subr.bf16.mxu0 0
    %2145 = vmatpush1.bf16.msra.mxu0 %v2039
    %2146 = vmatprep.subr.bf16.mxu0 0
    %2147 = vmatpush1.bf16.msra.mxu0 %v2040
    %2148 = vmatprep.subr.bf16.mxu0 0
    %2149 = vmatpush1.bf16.msra.mxu0 %v2041
    %2150 = vmatprep.subr.bf16.mxu0 0
    %2151 = vmatpush1.bf16.msra.mxu0 %v2042
    %2152 = vmatprep.subr.bf16.mxu0 0
    %2153 = vmatpush1.bf16.msra.mxu0 %v2043
    %2154 = vmatprep.subr.bf16.mxu0 0
    %2155 = vmatpush1.bf16.msra.mxu0 %v2044
    %2156 = vmatprep.subr.bf16.mxu0 0
    %2157 = vmatpush1.bf16.msra.mxu0 %v2045
    %2158 = vmatprep.subr.bf16.mxu0 0
    %2159 = vmatpush1.bf16.msra.mxu0 %v2046
    %2160 = vmatprep.subr.bf16.mxu0 0
    %2161 = vmatpush1.bf16.msra.mxu0 %v2047
    %2162 = vmatprep.subr.bf16.mxu0 0
    %2163 = vmatpush1.bf16.msra.mxu0 %v2048
    %2164 = vmatprep.subr.bf16.mxu0 0
    %2165 = vmatpush1.bf16.msra.mxu0 %v2049
    %2166 = vmatprep.subr.bf16.mxu0 0
    %2167 = vmatpush1.bf16.msra.mxu0 %v2050
    %2168 = vmatprep.subr.bf16.mxu0 0
    %2169 = vmatpush1.bf16.msra.mxu0 %v2051
    %2170 = vmatprep.subr.bf16.mxu0 0
    %2171 = vmatpush1.bf16.msra.mxu0 %v2052
    %2172 = vmatprep.subr.bf16.mxu0 0
    %2173 = vmatpush1.bf16.msra.mxu0 %v2053
    %2174 = vmatprep.mubr.bf16.mxu0 %v1780
    %2175 = vmatmul.mubr.bf16.gmra.mrb[0].mxu0 %v1779
    %v2176 = vpop.f32.mrb[0].mxu0
    %v2177 = vadd.f32 %v2137, %v2176
    %v2178 = vpop.f32.mrb[0].mxu0
    %v2179 = vpop.f32.mrb[0].mxu0
    %v2180 = vpop.f32.mrb[0].mxu0
    %2181 = vdwg.mxu0
    %2182 = vmatprep.subr.bf16.mxu0 0
    %2183 = vmatpush1.bf16.msra.mxu0 %v2054
    %2184 = vmatprep.subr.bf16.mxu0 0
    %2185 = vmatpush1.bf16.msra.mxu0 %v2055
    %2186 = vmatprep.subr.bf16.mxu0 0
    %2187 = vmatpush1.bf16.msra.mxu0 %v2056
    %2188 = vmatprep.subr.bf16.mxu0 0
    %2189 = vmatpush1.bf16.msra.mxu0 %v2057
    %2190 = vmatprep.subr.bf16.mxu0 0
    %2191 = vmatpush1.bf16.msra.mxu0 %v2058
    %2192 = vmatprep.subr.bf16.mxu0 0
    %2193 = vmatpush1.bf16.msra.mxu0 %v2059
    %2194 = vmatprep.subr.bf16.mxu0 0
    %2195 = vmatpush1.bf16.msra.mxu0 %v2060
    %2196 = vmatprep.subr.bf16.mxu0 0
    %2197 = vmatpush1.bf16.msra.mxu0 %v2061
    %2198 = vmatprep.subr.bf16.mxu0 0
    %2199 = vmatpush1.bf16.msra.mxu0 0
    %2200 = vmatprep.subr.bf16.mxu0 0
    %2201 = vmatpush1.bf16.msra.mxu0 0
    %2202 = vmatprep.subr.bf16.mxu0 0
    %2203 = vmatpush1.bf16.msra.mxu0 0
    %2204 = vmatprep.subr.bf16.mxu0 0
    %2205 = vmatpush1.bf16.msra.mxu0 0
    %2206 = vmatprep.subr.bf16.mxu0 0
    %2207 = vmatpush1.bf16.msra.mxu0 0
    %2208 = vmatprep.subr.bf16.mxu0 0
    %2209 = vmatpush1.bf16.msra.mxu0 0
    %2210 = vmatprep.subr.bf16.mxu0 0
    %2211 = vmatpush1.bf16.msra.mxu0 0
    %2212 = vmatprep.subr.bf16.mxu0 0
    %2213 = vmatpush1.bf16.msra.mxu0 0
    %2214 = vmatprep.mubr.bf16.mxu0 0
    %2215 = vmatmul.mubr.bf16.gmra.mrb[0].mxu0 %v1781
    %v2216 = vpop.f32.mrb[0].mxu0
    %v2217 = vadd.f32 %v2177, %v2216
    %v2218 = vpop.f32.mrb[0].mxu0
    %v2219 = vpop.f32.mrb[0].mxu0
    %v2220 = vpop.f32.mrb[0].mxu0
    %2221 = vdwg.mxu0
    %v2222 = vpack.c.bf16 %v1508, %v1508
    %v2223 = vpack.c.bf16 %v1510, %v1510
    %v2224 = vpack.c.bf16 %v1512, %v1512
    %v2225 = vpack.c.bf16 %v1514, %v1514
    %v2226 = vpack.c.bf16 %v1516, %v1516
    %2227 = vmatprep.subr.bf16.mxu0 0
    %2228 = vmatpush1.bf16.msra.mxu0 %v2022
    %2229 = vmatprep.subr.bf16.mxu0 0
    %2230 = vmatpush1.bf16.msra.mxu0 %v2023
    %2231 = vmatprep.subr.bf16.mxu0 0
    %2232 = vmatpush1.bf16.msra.mxu0 %v2024
    %2233 = vmatprep.subr.bf16.mxu0 0
    %2234 = vmatpush1.bf16.msra.mxu0 %v2025
    %2235 = vmatprep.subr.bf16.mxu0 0
    %2236 = vmatpush1.bf16.msra.mxu0 %v2026
    %2237 = vmatprep.subr.bf16.mxu0 0
    %2238 = vmatpush1.bf16.msra.mxu0 %v2027
    %2239 = vmatprep.subr.bf16.mxu0 0
    %2240 = vmatpush1.bf16.msra.mxu0 %v2028
    %2241 = vmatprep.subr.bf16.mxu0 0
    %2242 = vmatpush1.bf16.msra.mxu0 %v2029
    %2243 = vmatprep.subr.bf16.mxu0 0
    %2244 = vmatpush1.bf16.msra.mxu0 %v2030
    %2245 = vmatprep.subr.bf16.mxu0 0
    %2246 = vmatpush1.bf16.msra.mxu0 %v2031
    %2247 = vmatprep.subr.bf16.mxu0 0
    %2248 = vmatpush1.bf16.msra.mxu0 %v2032
    %2249 = vmatprep.subr.bf16.mxu0 0
    %2250 = vmatpush1.bf16.msra.mxu0 %v2033
    %2251 = vmatprep.subr.bf16.mxu0 0
    %2252 = vmatpush1.bf16.msra.mxu0 %v2034
    %2253 = vmatprep.subr.bf16.mxu0 0
    %2254 = vmatpush1.bf16.msra.mxu0 %v2035
    %2255 = vmatprep.subr.bf16.mxu0 0
    %2256 = vmatpush1.bf16.msra.mxu0 %v2036
    %2257 = vmatprep.subr.bf16.mxu0 0
    %2258 = vmatpush1.bf16.msra.mxu0 %v2037
    %2259 = vmatprep.mubr.bf16.mxu0 %v2223
    %2260 = vmatmul.mubr.bf16.gmra.mrb[0].mxu0 %v2222
    %v2261 = vpop.f32.mrb[0].mxu0
    %v2262 = vadd.f32 0.0, %v2261
    %v2263 = vpop.f32.mrb[0].mxu0
    %v2264 = vpop.f32.mrb[0].mxu0
    %v2265 = vpop.f32.mrb[0].mxu0
    %2266 = vdwg.mxu0
    %2267 = vmatprep.subr.bf16.mxu0 0
    %2268 = vmatpush1.bf16.msra.mxu0 %v2038
    %2269 = vmatprep.subr.bf16.mxu0 0
    %2270 = vmatpush1.bf16.msra.mxu0 %v2039
    %2271 = vmatprep.subr.bf16.mxu0 0
    %2272 = vmatpush1.bf16.msra.mxu0 %v2040
    %2273 = vmatprep.subr.bf16.mxu0 0
    %2274 = vmatpush1.bf16.msra.mxu0 %v2041
    %2275 = vmatprep.subr.bf16.mxu0 0
    %2276 = vmatpush1.bf16.msra.mxu0 %v2042
    %2277 = vmatprep.subr.bf16.mxu0 0
    %2278 = vmatpush1.bf16.msra.mxu0 %v2043
    %2279 = vmatprep.subr.bf16.mxu0 0
    %2280 = vmatpush1.bf16.msra.mxu0 %v2044
    %2281 = vmatprep.subr.bf16.mxu0 0
    %2282 = vmatpush1.bf16.msra.mxu0 %v2045
    %2283 = vmatprep.subr.bf16.mxu0 0
    %2284 = vmatpush1.bf16.msra.mxu0 %v2046
    %2285 = vmatprep.subr.bf16.mxu0 0
    %2286 = vmatpush1.bf16.msra.mxu0 %v2047
    %2287 = vmatprep.subr.bf16.mxu0 0
    %2288 = vmatpush1.bf16.msra.mxu0 %v2048
    %2289 = vmatprep.subr.bf16.mxu0 0
    %2290 = vmatpush1.bf16.msra.mxu0 %v2049
    %2291 = vmatprep.subr.bf16.mxu0 0
    %2292 = vmatpush1.bf16.msra.mxu0 %v2050
    %2293 = vmatprep.subr.bf16.mxu0 0
    %2294 = vmatpush1.bf16.msra.mxu0 %v2051
    %2295 = vmatprep.subr.bf16.mxu0 0
    %2296 = vmatpush1.bf16.msra.mxu0 %v2052
    %2297 = vmatprep.subr.bf16.mxu0 0
    %2298 = vmatpush1.bf16.msra.mxu0 %v2053
    %2299 = vmatprep.mubr.bf16.mxu0 %v2225
    %2300 = vmatmul.mubr.bf16.gmra.mrb[0].mxu0 %v2224
    %v2301 = vpop.f32.mrb[0].mxu0
    %v2302 = vadd.f32 %v2262, %v2301
    %v2303 = vpop.f32.mrb[0].mxu0
    %v2304 = vpop.f32.mrb[0].mxu0
    %v2305 = vpop.f32.mrb[0].mxu0
    %2306 = vdwg.mxu0
    %2307 = vmatprep.subr.bf16.mxu0 0
    %2308 = vmatpush1.bf16.msra.mxu0 %v2054
    %2309 = vmatprep.subr.bf16.mxu0 0
    %2310 = vmatpush1.bf16.msra.mxu0 %v2055
    %2311 = vmatprep.subr.bf16.mxu0 0
    %2312 = vmatpush1.bf16.msra.mxu0 %v2056
    %2313 = vmatprep.subr.bf16.mxu0 0
    %2314 = vmatpush1.bf16.msra.mxu0 %v2057
    %2315 = vmatprep.subr.bf16.mxu0 0
    %2316 = vmatpush1.bf16.msra.mxu0 %v2058
    %2317 = vmatprep.subr.bf16.mxu0 0
    %2318 = vmatpush1.bf16.msra.mxu0 %v2059
    %2319 = vmatprep.subr.bf16.mxu0 0
    %2320 = vmatpush1.bf16.msra.mxu0 %v2060
    %2321 = vmatprep.subr.bf16.mxu0 0
    %2322 = vmatpush1.bf16.msra.mxu0 %v2061
    %2323 = vmatprep.subr.bf16.mxu0 0
    %2324 = vmatpush1.bf16.msra.mxu0 0
    %2325 = vmatprep.subr.bf16.mxu0 0
    %2326 = vmatpush1.bf16.msra.mxu0 0
    %2327 = vmatprep.subr.bf16.mxu0 0
    %2328 = vmatpush1.bf16.msra.mxu0 0
    %2329 = vmatprep.subr.bf16.mxu0 0
    %2330 = vmatpush1.bf16.msra.mxu0 0
    %2331 = vmatprep.subr.bf16.mxu0 0
    %2332 = vmatpush1.bf16.msra.mxu0 0
    %2333 = vmatprep.subr.bf16.mxu0 0
    %2334 = vmatpush1.bf16.msra.mxu0 0
    %2335 = vmatprep.subr.bf16.mxu0 0
    %2336 = vmatpush1.bf16.msra.mxu0 0
    %2337 = vmatprep.subr.bf16.mxu0 0
    %2338 = vmatpush1.bf16.msra.mxu0 0
    %2339 = vmatprep.mubr.bf16.mxu0 0
    %2340 = vmatmul.mubr.bf16.gmra.mrb[0].mxu0 %v2226
    %v2341 = vpop.f32.mrb[0].mxu0
    %v2342 = vadd.f32 %v2302, %v2341
    %v2343 = vpop.f32.mrb[0].mxu0
    %v2344 = vpop.f32.mrb[0].mxu0
    %v2345 = vpop.f32.mrb[0].mxu0
    %2346 = vdwg.mxu0
    %v2347 = vrcp.pop %v2342
    %v2348 = vmul.f32 %v2217, %v2347
    %v2349 = vpack.c.bf16 %v2348, %v2348
    %v2350 = vld [vmem:[#allocation10] sm:$0xff]
    %v2351 = vld [vmem:[#allocation10 + $0x8] sm:$0xff]
    %v2352 = vld [vmem:[#allocation10 + $0x10] sm:$0xff]
    %v2353 = vld [vmem:[#allocation10 + $0x18] sm:$0xff]
    %v2354 = vld [vmem:[#allocation10 + $0x20] sm:$0xff]
    %v2355 = vld [vmem:[#allocation10 + $0x28] sm:$0xff]
    %v2356 = vld [vmem:[#allocation10 + $0x30] sm:$0xff]
    %v2357 = vld [vmem:[#allocation10 + $0x38] sm:$0xff]
    %v2358 = vld [vmem:[#allocation10 + $0x40] sm:$0xff]
    %v2359 = vld [vmem:[#allocation10 + $0x48] sm:$0xff]
    %v2370 = vunpack.c.l.b16 %v2350
    %v2371 = vunpack.c.h.b16 %v2350
    %v2372 = vunpack.c.l.b16 %v2351
    %v2373 = vunpack.c.h.b16 %v2351
    %v2374 = vunpack.c.l.b16 %v2352
    %v2375 = vunpack.c.h.b16 %v2352
    %v2376 = vunpack.c.l.b16 %v2353
    %v2377 = vunpack.c.h.b16 %v2353
    %v2378 = vunpack.c.l.b16 %v2354
    %v2379 = vunpack.c.h.b16 %v2354
    %v2380 = vunpack.c.l.b16 %v2355
    %v2381 = vunpack.c.h.b16 %v2355
    %v2382 = vunpack.c.l.b16 %v2356
    %v2383 = vunpack.c.h.b16 %v2356
    %v2384 = vunpack.c.l.b16 %v2357
    %v2385 = vunpack.c.h.b16 %v2357
    %v2386 = vunpack.c.l.b16 %v2358
    %v2387 = vunpack.c.h.b16 %v2358
    %v2388 = vunpack.c.l.b16 %v2359
    %v2389 = vunpack.c.h.b16 %v2359
    %v2390 = vpack.c.b16 %v2372, %v2370
    %v2391 = vpack.c.b16 %v2373, %v2371
    %v2392 = vpack.c.b16 %v2376, %v2374
    %v2393 = vpack.c.b16 %v2377, %v2375
    %v2394 = vpack.c.b16 %v2380, %v2378
    %v2395 = vpack.c.b16 %v2381, %v2379
    %v2396 = vpack.c.b16 %v2384, %v2382
    %v2397 = vpack.c.b16 %v2385, %v2383
    %v2398 = vpack.c.b16 %v2388, %v2386
    %v2399 = vpack.c.b16 %v2389, %v2387
    %vm2410 = vcmask 654336
    %v2412 = vsel %vm2410, %v2349, 0
    %2414 = vmatprep.subr.bf16.mxu0 %v2391
    %2415 = vmatpush1.bf16.msra.mxu0 %v2390
    %2416 = vmatprep.subr.bf16.mxu0 %v2393
    %2417 = vmatpush1.bf16.msra.mxu0 %v2392
    %2418 = vmatprep.subr.bf16.mxu0 %v2395
    %2419 = vmatpush1.bf16.msra.mxu0 %v2394
    %2420 = vmatprep.subr.bf16.mxu0 %v2397
    %2421 = vmatpush1.bf16.msra.mxu0 %v2396
    %2422 = vmatprep.subr.bf16.mxu0 %v2399
    %2423 = vmatpush1.bf16.msra.mxu0 %v2398
    %2424 = vmatprep.subr.bf16.mxu0 0
    %2425 = vmatpush1.bf16.msra.mxu0 0
    %2426 = vmatprep.subr.bf16.mxu0 0
    %2427 = vmatpush1.bf16.msra.mxu0 0
    %2428 = vmatprep.subr.bf16.mxu0 0
    %2429 = vmatpush1.bf16.msra.mxu0 0
    %2430 = vmatprep.subr.bf16.mxu0 0
    %2431 = vmatpush1.bf16.msra.mxu0 0
    %2432 = vmatprep.subr.bf16.mxu0 0
    %2433 = vmatpush1.bf16.msra.mxu0 0
    %2434 = vmatprep.subr.bf16.mxu0 0
    %2435 = vmatpush1.bf16.msra.mxu0 0
    %2436 = vmatprep.subr.bf16.mxu0 0
    %2437 = vmatpush1.bf16.msra.mxu0 0
    %2438 = vmatprep.subr.bf16.mxu0 0
    %2439 = vmatpush1.bf16.msra.mxu0 0
    %2440 = vmatprep.subr.bf16.mxu0 0
    %2441 = vmatpush1.bf16.msra.mxu0 0
    %2442 = vmatprep.subr.bf16.mxu0 0
    %2443 = vmatpush1.bf16.msra.mxu0 0
    %2444 = vmatprep.subr.bf16.mxu0 0
    %2445 = vmatpush1.bf16.msra.mxu0 0
    %2446 = vmatprep.mubr.bf16.mxu0 0
    %2447 = vmatmul.mubr.bf16.gmra.mrb[0].mxu0 %v2412
    %v2448 = vpop.f32.mrb[0].mxu0
    %v2449 = vadd.f32 0.0, %v2448
    %v2450 = vpop.f32.mrb[0].mxu0
    %v2451 = vadd.f32 0.0, %v2450
    %v2452 = vpop.f32.mrb[0].mxu0
    %v2453 = vpop.f32.mrb[0].mxu0
    %2454 = vdwg.mxu0
    %v2455 = vadd.f32 %v1496, %v2449
    %v2456 = vadd.f32 %v1498, %v2451
    %v2457 = vpack.c.bf16 %v2455, %v2455
    %v2458 = vpack.c.bf16 %v2456, %v2456
    %v2459 = vld [vmem:[#allocation11] sm:$0xff]
    %v2460 = vld [vmem:[#allocation11 + $0x8] sm:$0xff]
    %v2461 = vld [vmem:[#allocation11 + $0x10] sm:$0xff]
    %v2462 = vld [vmem:[#allocation11 + $0x18] sm:$0xff]
    %v2463 = vld [vmem:[#allocation11 + $0x20] sm:$0xff]
    %v2464 = vld [vmem:[#allocation11 + $0x28] sm:$0xff]
    %v2465 = vld [vmem:[#allocation11 + $0x30] sm:$0xff]
    %v2466 = vld [vmem:[#allocation11 + $0x38] sm:$0xff]
    %v2467 = vld [vmem:[#allocation11 + $0x40] sm:$0xff]
    %v2468 = vld [vmem:[#allocation11 + $0x48] sm:$0xff]
    %v2469 = vld [vmem:[#allocation11 + $0x50] sm:$0xff]
    %v2470 = vld [vmem:[#allocation11 + $0x58] sm:$0xff]
    %v2471 = vld [vmem:[#allocation11 + $0x60] sm:$0xff]
    %v2472 = vld [vmem:[#allocation11 + $0x68] sm:$0xff]
    %v2473 = vld [vmem:[#allocation11 + $0x70] sm:$0xff]
    %v2474 = vld [vmem:[#allocation11 + $0x78] sm:$0xff]
    %v2475 = vld [vmem:[#allocation11 + $0x80] sm:$0xff]
    %v2476 = vld [vmem:[#allocation11 + $0x88] sm:$0xff]
    %v2477 = vld [vmem:[#allocation11 + $0x90] sm:$0xff]
    %v2478 = vld [vmem:[#allocation11 + $0x98] sm:$0xff]
    %v2479 = vld [vmem:[#allocation11 + $0xa0] sm:$0xff]
    %v2480 = vld [vmem:[#allocation11 + $0xa8] sm:$0xff]
    %v2481 = vld [vmem:[#allocation11 + $0xb0] sm:$0xff]
    %v2482 = vld [vmem:[#allocation11 + $0xb8] sm:$0xff]
    %v2483 = vld [vmem:[#allocation11 + $0xc0] sm:$0xff]
    %v2484 = vld [vmem:[#allocation11 + $0xc8] sm:$0xff]
    %v2485 = vld [vmem:[#allocation11 + $0xd0] sm:$0xff]
    %v2486 = vld [vmem:[#allocation11 + $0xd8] sm:$0xff]
    %v2487 = vld [vmem:[#allocation11 + $0xe0] sm:$0xff]
    %v2488 = vld [vmem:[#allocation11 + $0xe8] sm:$0xff]
    %v2489 = vld [vmem:[#allocation11 + $0xf0] sm:$0xff]
    %v2490 = vld [vmem:[#allocation11 + $0xf8] sm:$0xff]
    %v2491 = vld [vmem:[%s14] sm:$0x3]
    %v2493 = vlaneseq
    %v2494 = vshrl.u32 %v2493, 7
    %v2495 = vsub.s32 0, %v2494
    %v2496 = vrot.slane %v2491, %v2495
    %v2497 = vlaneseq
    %v2498 = vshrl.u32 %v2497, 7
    %v2499 = vsub.s32 1, %v2498
    %v2500 = vrot.slane %v2491, %v2499
    %v2535 = vunpack.c.l.b16 %v2459
    %v2536 = vunpack.c.h.b16 %v2459
    %v2537 = vunpack.c.l.b16 %v2460
    %v2538 = vunpack.c.h.b16 %v2460
    %v2539 = vunpack.c.l.b16 %v2461
    %v2540 = vunpack.c.h.b16 %v2461
    %v2541 = vunpack.c.l.b16 %v2462
    %v2542 = vunpack.c.h.b16 %v2462
    %v2543 = vunpack.c.l.b16 %v2463
    %v2544 = vunpack.c.h.b16 %v2463
    %v2545 = vunpack.c.l.b16 %v2464
    %v2546 = vunpack.c.h.b16 %v2464
    %v2547 = vunpack.c.l.b16 %v2465
    %v2548 = vunpack.c.h.b16 %v2465
    %v2549 = vunpack.c.l.b16 %v2466
    %v2550 = vunpack.c.h.b16 %v2466
    %v2551 = vunpack.c.l.b16 %v2467
    %v2552 = vunpack.c.h.b16 %v2467
    %v2553 = vunpack.c.l.b16 %v2468
    %v2554 = vunpack.c.h.b16 %v2468
    %v2555 = vunpack.c.l.b16 %v2469
    %v2556 = vunpack.c.h.b16 %v2469
    %v2557 = vunpack.c.l.b16 %v2470
    %v2558 = vunpack.c.h.b16 %v2470
    %v2559 = vunpack.c.l.b16 %v2471
    %v2560 = vunpack.c.h.b16 %v2471
    %v2561 = vunpack.c.l.b16 %v2472
    %v2562 = vunpack.c.h.b16 %v2472
    %v2563 = vunpack.c.l.b16 %v2473
    %v2564 = vunpack.c.h.b16 %v2473
    %v2565 = vunpack.c.l.b16 %v2474
    %v2566 = vunpack.c.h.b16 %v2474
    %v2567 = vunpack.c.l.b16 %v2475
    %v2568 = vunpack.c.h.b16 %v2475
    %v2569 = vunpack.c.l.b16 %v2476
    %v2570 = vunpack.c.h.b16 %v2476
    %v2571 = vunpack.c.l.b16 %v2477
    %v2572 = vunpack.c.h.b16 %v2477
    %v2573 = vunpack.c.l.b16 %v2478
    %v2574 = vunpack.c.h.b16 %v2478
    %v2575 = vunpack.c.l.b16 %v2479
    %v2576 = vunpack.c.h.b16 %v2479
    %v2577 = vunpack.c.l.b16 %v2480
    %v2578 = vunpack.c.h.b16 %v2480
    %v2579 = vunpack.c.l.b16 %v2481
    %v2580 = vunpack.c.h.b16 %v2481
    %v2581 = vunpack.c.l.b16 %v2482
    %v2582 = vunpack.c.h.b16 %v2482
    %v2583 = vunpack.c.l.b16 %v2483
    %v2584 = vunpack.c.h.b16 %v2483
    %v2585 = vunpack.c.l.b16 %v2484
    %v2586 = vunpack.c.h.b16 %v2484
    %v2587 = vunpack.c.l.b16 %v2485
    %v2588 = vunpack.c.h.b16 %v2485
    %v2589 = vunpack.c.l.b16 %v2486
    %v2590 = vunpack.c.h.b16 %v2486
    %v2591 = vunpack.c.l.b16 %v2487
    %v2592 = vunpack.c.h.b16 %v2487
    %v2593 = vunpack.c.l.b16 %v2488
    %v2594 = vunpack.c.h.b16 %v2488
    %v2595 = vunpack.c.l.b16 %v2489
    %v2596 = vunpack.c.h.b16 %v2489
    %v2597 = vunpack.c.l.b16 %v2490
    %v2598 = vunpack.c.h.b16 %v2490
    %v2599 = vpack.c.b16 %v2537, %v2535
    %v2600 = vpack.c.b16 %v2538, %v2536
    %v2601 = vpack.c.b16 %v2541, %v2539
    %v2602 = vpack.c.b16 %v2542, %v2540
    %v2603 = vpack.c.b16 %v2545, %v2543
    %v2604 = vpack.c.b16 %v2546, %v2544
    %v2605 = vpack.c.b16 %v2549, %v2547
    %v2606 = vpack.c.b16 %v2550, %v2548
    %v2607 = vpack.c.b16 %v2553, %v2551
    %v2608 = vpack.c.b16 %v2554, %v2552
    %v2609 = vpack.c.b16 %v2557, %v2555
    %v2610 = vpack.c.b16 %v2558, %v2556
    %v2611 = vpack.c.b16 %v2561, %v2559
    %v2612 = vpack.c.b16 %v2562, %v2560
    %v2613 = vpack.c.b16 %v2565, %v2563
    %v2614 = vpack.c.b16 %v2566, %v2564
    %v2615 = vpack.c.b16 %v2569, %v2567
    %v2616 = vpack.c.b16 %v2570, %v2568
    %v2617 = vpack.c.b16 %v2573, %v2571
    %v2618 = vpack.c.b16 %v2574, %v2572
    %v2619 = vpack.c.b16 %v2577, %v2575
    %v2620 = vpack.c.b16 %v2578, %v2576
    %v2621 = vpack.c.b16 %v2581, %v2579
    %v2622 = vpack.c.b16 %v2582, %v2580
    %v2623 = vpack.c.b16 %v2585, %v2583
    %v2624 = vpack.c.b16 %v2586, %v2584
    %v2625 = vpack.c.b16 %v2589, %v2587
    %v2626 = vpack.c.b16 %v2590, %v2588
    %v2627 = vpack.c.b16 %v2593, %v2591
    %v2628 = vpack.c.b16 %v2594, %v2592
    %v2629 = vpack.c.b16 %v2597, %v2595
    %v2630 = vpack.c.b16 %v2598, %v2596
    %2663 = vmatprep.subr.bf16.mxu0 %v2600
    %2664 = vmatpush1.bf16.msra.mxu0 %v2599
    %2665 = vmatprep.subr.bf16.mxu0 %v2602
    %2666 = vmatpush1.bf16.msra.mxu0 %v2601
    %2667 = vmatprep.subr.bf16.mxu0 %v2604
    %2668 = vmatpush1.bf16.msra.mxu0 %v2603
    %2669 = vmatprep.subr.bf16.mxu0 %v2606
    %2670 = vmatpush1.bf16.msra.mxu0 %v2605
    %2671 = vmatprep.subr.bf16.mxu0 %v2608
    %2672 = vmatpush1.bf16.msra.mxu0 %v2607
    %2673 = vmatprep.subr.bf16.mxu0 %v2610
    %2674 = vmatpush1.bf16.msra.mxu0 %v2609
    %2675 = vmatprep.subr.bf16.mxu0 %v2612
    %2676 = vmatpush1.bf16.msra.mxu0 %v2611
    %2677 = vmatprep.subr.bf16.mxu0 %v2614
    %2678 = vmatpush1.bf16.msra.mxu0 %v2613
    %2679 = vmatprep.subr.bf16.mxu0 %v2616
    %2680 = vmatpush1.bf16.msra.mxu0 %v2615
    %2681 = vmatprep.subr.bf16.mxu0 %v2618
    %2682 = vmatpush1.bf16.msra.mxu0 %v2617
    %2683 = vmatprep.subr.bf16.mxu0 %v2620
    %2684 = vmatpush1.bf16.msra.mxu0 %v2619
    %2685 = vmatprep.subr.bf16.mxu0 %v2622
    %2686 = vmatpush1.bf16.msra.mxu0 %v2621
    %2687 = vmatprep.subr.bf16.mxu0 %v2624
    %2688 = vmatpush1.bf16.msra.mxu0 %v2623
    %2689 = vmatprep.subr.bf16.mxu0 %v2626
    %2690 = vmatpush1.bf16.msra.mxu0 %v2625
    %2691 = vmatprep.subr.bf16.mxu0 %v2628
    %2692 = vmatpush1.bf16.msra.mxu0 %v2627
    %2693 = vmatprep.subr.bf16.mxu0 %v2630
    %2694 = vmatpush1.bf16.msra.mxu0 %v2629
    %2695 = vmatprep.mubr.bf16.mxu0 %v2458
    %2696 = vmatmul.mubr.bf16.gmra.mrb[0].mxu0 %v2457
    %v2697 = vpop.f32.mrb[0].mxu0
    %v2698 = vadd.f32 %v2496, %v2697
    %v2699 = vpop.f32.mrb[0].mxu0
    %v2700 = vadd.f32 %v2500, %v2699
    %v2701 = vpop.f32.mrb[0].mxu0
    %v2702 = vpop.f32.mrb[0].mxu0
    %2703 = vdwg.mxu0
    %v2704 = vmul.f32 %v2698, 0.01
    %v2705 = vmul.f32 %v2700, 0.01
    %v2706 = vmax.f32 %v2698, %v2704
    %v2707 = vmax.f32 %v2700, %v2705
    %v2710 = vcombine.low %v2706, %v2707
    %2712 = vst [vmem:[#allocation13] sm:$0x77] %v2710
    // Predicated region
    $region86: #{tpu_custom_call.1} parent=1 // pred_check
      _
    $region87: #{tpu_custom_call.1} parent=1 // pred_check_branch
      %2714 = sbr.rel (0) target = $region89
    $region88: #{tpu_custom_call.1} parent=1 // pred_region
      %s2716 = ssub.s32 128, 128
      %2717 = vsyncadd [#allocation4], %s2716
      %s2719 = sshll.u32 [#allocation13], 4
      %s2720 = int_to_ptr.vmem [resolvable:$true] %s2719
      %2722 = dma.vmem_to_hbm [thread:$0]  %s2720, 128, %s15, [#allocation4]
    $region89: #{tpu_custom_call.1} parent=1 // pred_fallthru
      _
    // Predicated region
    $region90: #{tpu_custom_call.1} parent=1 // pred_check
      _
    $region91: #{tpu_custom_call.1} parent=1 // pred_check_branch
      %2724 = sbr.rel (0) target = $region93
    $region92: #{tpu_custom_call.1} parent=1 // pred_region
      %2725 = dma.done [#allocation4], 128
    $region93: #{tpu_custom_call.1} parent=1 // pred_fallthru
      _
    %2726 = vsyncpa [#allocation3], 1
    %2727 = vsyncpa [#allocation6], 1
    %2728 = vsyncpa [#allocation9], 1
    %2729 = vsyncpa [#allocation12], 1
    %2730 = vsyncpa [#allocation4], 1

</llo_original>
